<compile_context>
chip_gen: v6e
topology: v6e:2x2x1
jax: 0.10.0
libtpu: 0.0.40
codegen_flags: <defaults>
</compile_context>

<pallas_src>
import functools

import jax
import jax.numpy as jnp
from jax.experimental import pallas as pl
from jax.experimental.pallas import tpu as pltpu


def _reattention_kernel(x_ref, xt_ref, wq_ref, wkt_ref, wv_ref, rw_ref,
                        rwm_ref, gram_ref, gamma_ref, beta_ref, wout_ref,
                        bout_ref, o_ref,
                        k_scr, v_scr, q_scr, p_scr, og_scr,
                        *, heads, dim_head, eps, tq, n_real, masked):
    qi = pl.program_id(1)
    n_pad = p_scr.shape[-1]
    f32 = jnp.float32

    # ---- K / V projection: once per batch element, inner-wide matmuls -------
    @pl.when(qi == 0)
    def _():
        # K pre-transposed: (inner, n_pad) = Wk^T (inner, dim) @ x^T (dim, n_pad)
        k_scr[...] = jnp.dot(wkt_ref[...], xt_ref[0],
                             preferred_element_type=f32).astype(k_scr.dtype)
        # V: (n_pad, inner)
        v_scr[...] = jnp.dot(x_ref[0], wv_ref[...],
                             preferred_element_type=f32).astype(v_scr.dtype)

    # ---- Q projection for this row tile (softmax scale pre-folded into Wq) --
    row0 = pl.multiple_of(qi * tq, tq)
    x_q = x_ref[0, pl.ds(row0, tq), :]                           # (tq, dim) bf16
    q_scr[...] = jnp.dot(x_q, wq_ref[...],
                         preferred_element_type=f32).astype(q_scr.dtype)

    if masked:  # static python bool: only emitted when n was padded
        col = jax.lax.broadcasted_iota(jnp.int32, (tq, n_pad), 1)
        key_bias = jnp.where(col < n_real, 0.0, -1e30).astype(f32)

    # ---- per-head scores + softmax; probs -> bf16 scratch; mu accumulated ---
    mu = None
    for h in range(heads):
        c0 = h * dim_head
        s_h = jnp.dot(q_scr[:, pl.ds(c0, dim_head)],
                      k_scr[pl.ds(c0, dim_head), :],
                      preferred_element_type=f32)                # (tq, n_pad)
        if masked:
            s_h = s_h + key_bias
        s_h = s_h - jnp.max(s_h, axis=-1, keepdims=True)
        e_h = jnp.exp(s_h)
        p_h = (e_h * pl.reciprocal(jnp.sum(e_h, axis=-1, keepdims=True),
                                   approx=True)).astype(p_scr.dtype)
        p_scr[h] = p_h
        # mu = mean_g attn2[g] = sum_h probs[h] * mean_g rw[h, g]
        term = p_h.astype(f32) * rwm_ref[h]
        mu = term if mu is None else mu + term

    # ---- E_g[attn2^2] via the Gram matrix of rw (pre-scaled by 1/heads) -----
    sqm = None
    for h in range(heads):
        ph = p_scr[h].astype(f32)
        t = (ph * ph) * gram_ref[h, h]
        sqm = t if sqm is None else sqm + t
        for h2 in range(h + 1, heads):
            sqm = sqm + (ph * p_scr[h2].astype(f32)) * (2.0 * gram_ref[h, h2])
    var = jnp.maximum(sqm - mu * mu, 0.0)                        # biased LN var
    inv_std = jax.lax.rsqrt(var + eps)

    # ---- per output head: mix -> LayerNorm -> @V, gathered into (tq, inner) -
    for g in range(heads):
        a2 = None
        for h in range(heads):
            t = p_scr[h].astype(f32) * rw_ref[h, g]
            a2 = t if a2 is None else a2 + t
        a_g = ((a2 - mu) * inv_std * gamma_ref[g]
               + beta_ref[g]).astype(jnp.bfloat16)               # (tq, n_pad)
        c0 = g * dim_head
        o_g = jnp.dot(a_g, v_scr[:, pl.ds(c0, dim_head)],
                      preferred_element_type=f32)                # (tq, dh)
        og_scr[:, pl.ds(c0, dim_head)] = o_g.astype(og_scr.dtype)

    # ---- single fused output projection (contraction K = inner) -------------
    y = jnp.dot(og_scr[...], wout_ref[...], preferred_element_type=f32)
    o_ref[0] = (y + bout_ref[...]).astype(o_ref.dtype)


def _pick_tile(n, target):
    """Return (tq, n_pad, masked): q-row tile, padded seq length, key-mask flag."""
    if n <= target:
        return n, n, False
    t = max(target - (target % 8), 8)
    tt = t
    while tt >= 8:
        if n % tt == 0:
            return tt, n, False
        tt -= 8
    # No multiple-of-8 divisor <= target: pad n up and mask padded key columns.
    n_pad = ((n + t - 1) // t) * t
    return t, n_pad, True


def _vmem_capacity_bytes():
    try:
        info = pltpu.get_tpu_info()
        return int(getattr(info, "vmem_capacity_bytes", 128 * 1024 * 1024))
    except Exception:  # conservative default if the query is unavailable
        return 128 * 1024 * 1024


def reattention(x, wqkv, rw, gamma, beta, wout, bout, *, heads, dim_head,
                tq_target=None):
    b, n, dim = x.shape
    inner = heads * dim_head
    scale = dim_head ** -0.5
    out_dtype = x.dtype

    # Generation-aware tile / VMEM-limit selection (v7x: 64 MiB VMEM per TC).
    vmem_cap = _vmem_capacity_bytes()
    small_vmem = vmem_cap <= 96 * 1024 * 1024
    if tq_target is None:
        tq_target = 128 if small_vmem else 256
    vmem_limit = (32 if small_vmem else 64) * 1024 * 1024

    tq, n_pad, masked = _pick_tile(n, tq_target)
    nq = n_pad // tq

    # One-time layout plumbing / constant folding in the wrapper.
    wq = (wqkv[:, 0 * inner:1 * inner] * scale).astype(jnp.bfloat16)  # (dim, inner)
    wkt = wqkv[:, 1 * inner:2 * inner].T.astype(jnp.bfloat16)         # (inner, dim)
    wv = wqkv[:, 2 * inner:3 * inner].astype(jnp.bfloat16)            # (dim, inner)
    wout_bf = wout.astype(jnp.bfloat16)                               # (inner, dim)
    bout_f = bout.reshape(1, dim).astype(jnp.float32)

    rw_f = rw.astype(jnp.float32)
    rw_mean = rw_f.mean(axis=1)                                       # (heads,)
    gram_s = (rw_f @ rw_f.T) / heads                                  # (heads, heads)
    gamma_f = gamma.astype(jnp.float32)
    beta_f = beta.astype(jnp.float32)

    x_bf = x.astype(jnp.bfloat16)
    if n_pad != n:
        x_bf = jnp.pad(x_bf, ((0, 0), (0, n_pad - n), (0, 0)))
    xt_bf = jnp.swapaxes(x_bf, 1, 2)                                  # (b, dim, n_pad)

    kernel = functools.partial(_reattention_kernel, heads=heads,
                               dim_head=dim_head, eps=1e-5, tq=tq,
                               n_real=n, masked=masked)

    vmem = pl.BlockSpec(memory_space=pltpu.MemorySpace.VMEM)
    smem = pl.BlockSpec(memory_space=pltpu.MemorySpace.SMEM)

    out = pl.pallas_call(
        kernel,
        out_shape=jax.ShapeDtypeStruct((b, n_pad, dim), out_dtype),
        grid=(b, nq),
        in_specs=[
            pl.BlockSpec((1, n_pad, dim), lambda bi, qi: (bi, 0, 0)),  # x
            pl.BlockSpec((1, dim, n_pad), lambda bi, qi: (bi, 0, 0)),  # x^T
            vmem, vmem, vmem,             # Wq (pre-scaled), Wk^T, Wv (bf16)
            smem, smem, smem,             # rw, rw row-means, rw Gram / heads
            smem, smem,                   # LayerNorm gamma, beta
            vmem, vmem,                   # Wout, bout
        ],
        out_specs=pl.BlockSpec((1, tq, dim), lambda bi, qi: (bi, qi, 0)),
        scratch_shapes=[
            pltpu.VMEM((inner, n_pad), jnp.bfloat16),      # K^T
            pltpu.VMEM((n_pad, inner), jnp.bfloat16),      # V
            pltpu.VMEM((tq, inner), jnp.bfloat16),         # Q tile
            pltpu.VMEM((heads, tq, n_pad), jnp.bfloat16),  # softmax probs
            pltpu.VMEM((tq, inner), jnp.bfloat16),         # gathered per-head outs
        ],
        compiler_params=pltpu.CompilerParams(
            # Batch axis parallel (megacore); q-tile axis must stay sequential
            # because K/V scratch is filled at qi == 0 and reused.
            dimension_semantics=("parallel", "arbitrary"),
            vmem_limit_bytes=vmem_limit,
        ),
    )(x_bf, xt_bf, wq, wkt, wv, rw_f, rw_mean, gram_s, gamma_f, beta_f,
      wout_bf, bout_f)

    if n_pad != n:
        out = out[:, :n, :]
    return out


def reattention_ref(x, wqkv, rw, gamma, beta, wout, bout, *, heads, dim_head):
    """Pure-JAX (f32) reference mirroring the PyTorch forward exactly."""
    b, n, dim = x.shape
    inner = heads * dim_head
    scale = dim_head ** -0.5
    qkv = x @ wqkv
    q, k, v = jnp.split(qkv, 3, axis=-1)

    def split_heads(t):
        return t.reshape(b, n, heads, dim_head).transpose(0, 2, 1, 3)

    q, k, v = map(split_heads, (q, k, v))
    dots = jnp.einsum('bhid,bhjd->bhij', q, k) * scale
    attn = jax.nn.softmax(dots, axis=-1)
    attn = jnp.einsum('bhij,hg->bgij', attn, rw)
    a = attn.transpose(0, 2, 3, 1)
    mu = a.mean(-1, keepdims=True)
    var = ((a - mu) ** 2).mean(-1, keepdims=True)
    a = (a - mu) / jnp.sqrt(var + 1e-5) * gamma + beta
    attn = a.transpose(0, 3, 1, 2)
    out = jnp.einsum('bhij,bhjd->bhid', attn, v)
    out = out.transpose(0, 2, 1, 3).reshape(b, n, inner)
    return out @ wout + bout.reshape(1, 1, dim)


if __name__ == "__main__":
    # Small shapes consistent with the module: dim=32, heads=4, dim_head=16.
    b, dim, heads, dim_head = 2, 32, 4, 16
    inner = heads * dim_head

    key = jax.random.PRNGKey(0)
    k_x, k_qkv, k_rw, k_out, k_b = jax.random.split(key, 5)

    wqkv = jax.random.normal(k_qkv, (dim, 3 * inner), jnp.float32) * (dim ** -0.5)
    rw = jax.random.normal(k_rw, (heads, heads), jnp.float32)       # reattn_weights
    gamma = jnp.ones((heads,), jnp.float32)                         # LayerNorm weight
    beta = jnp.zeros((heads,), jnp.float32)                         # LayerNorm bias
    wout = jax.random.normal(k_out, (inner, dim), jnp.float32) * (inner ** -0.5)
    bout = jax.random.normal(k_b, (1, dim), jnp.float32) * 0.01

    def check(n, tq_target, tol=5e-2, tag=""):
        xx = jax.random.normal(jax.random.fold_in(k_x, n), (b, n, dim), jnp.float32)
        got = reattention(xx, wqkv, rw, gamma, beta, wout, bout,
                          heads=heads, dim_head=dim_head, tq_target=tq_target)
        got = jax.block_until_ready(got)
        ref = reattention_ref(xx, wqkv, rw, gamma, beta, wout, bout,
                              heads=heads, dim_head=dim_head)
        assert got.shape == (b, n, dim)
        rel = float(jnp.linalg.norm(got - ref) / jnp.linalg.norm(ref))
        # bf16 matmul operands / bf16 probs scratch (f32 accumulation) -> loose tol.
        assert rel < tol, f"{tag} mismatch vs reference (rel L2 err {rel:.3e})"

    # 1) single q-tile path.
    check(16, None, tag="single-tile")
    # 2) multi-q-tile path (K/V scratch reuse across q tiles).
    check(32, 16, tag="multi-tile")
    # 3) ragged n with no multiple-of-8 divisor -> padded + key-masked softmax.
    check(20, 16, tag="ragged/padded")

    print("KERNEL_OK")
</pallas_src>

<mosaic_0001>
module attributes {stable_mosaic.version = 11 : i64} {
  func.func @_reattention_kernel(%arg0: i32, %arg1: i32, %arg2: memref<1x16x32xbf16, #tpu.memory_space<vmem>>, %arg3: memref<1x32x16xbf16, #tpu.memory_space<vmem>>, %arg4: memref<32x64xbf16, #tpu.memory_space<vmem>>, %arg5: memref<64x32xbf16, #tpu.memory_space<vmem>>, %arg6: memref<32x64xbf16, #tpu.memory_space<vmem>>, %arg7: memref<4x4xf32, #tpu.memory_space<smem>>, %arg8: memref<4xf32, #tpu.memory_space<smem>>, %arg9: memref<4x4xf32, #tpu.memory_space<smem>>, %arg10: memref<4xf32, #tpu.memory_space<smem>>, %arg11: memref<4xf32, #tpu.memory_space<smem>>, %arg12: memref<64x32xbf16, #tpu.memory_space<vmem>>, %arg13: memref<1x32xf32, #tpu.memory_space<vmem>>, %arg14: memref<1x16x32xf32, #tpu.memory_space<vmem>>, %arg15: memref<64x16xbf16, #tpu.memory_space<vmem>>, %arg16: memref<16x64xbf16, #tpu.memory_space<vmem>>, %arg17: memref<16x64xbf16, #tpu.memory_space<vmem>>, %arg18: memref<4x16x16xbf16, #tpu.memory_space<vmem>>, %arg19: memref<16x64xbf16, #tpu.memory_space<vmem>>) attributes {dimension_semantics = [#tpu.dimension_semantics<parallel>, #tpu.dimension_semantics<arbitrary>], iteration_bounds = array<i64: 2, 1>, scalar_prefetch = 0 : i64, scratch_operands = 5 : i64, tpu.core_type = #tpu.core_type<tc>, window_params = [{transform_indices = @transform_0, window_bounds = array<i64: 1, 16, 32>}, {transform_indices = @transform_1, window_bounds = array<i64: 1, 32, 16>}, {pipeline_mode = #tpu.pipeline_mode<synchronous>, transform_indices = @transform_2, window_bounds = array<i64: 32, 64>}, {pipeline_mode = #tpu.pipeline_mode<synchronous>, transform_indices = @transform_3, window_bounds = array<i64: 64, 32>}, {pipeline_mode = #tpu.pipeline_mode<synchronous>, transform_indices = @transform_4, window_bounds = array<i64: 32, 64>}, {transform_indices = @transform_5, window_bounds = array<i64: 4, 4>}, {transform_indices = @transform_6, window_bounds = array<i64: 4>}, {transform_indices = @transform_7, window_bounds = array<i64: 4, 4>}, {transform_indices = @transform_8, window_bounds = array<i64: 4>}, {transform_indices = @transform_9, window_bounds = array<i64: 4>}, {pipeline_mode = #tpu.pipeline_mode<synchronous>, transform_indices = @transform_10, window_bounds = array<i64: 64, 32>}, {pipeline_mode = #tpu.pipeline_mode<synchronous>, transform_indices = @transform_11, window_bounds = array<i64: 1, 32>}, {transform_indices = @transform_12, window_bounds = array<i64: 1, 16, 32>}]} {
    %c0_i32 = arith.constant 0 : i32
    %0 = arith.cmpi eq, %arg1, %c0_i32 : i32
    %1 = arith.extui %0 : i1 to i32
    %c0_i32_0 = arith.constant 0 : i32
    %2 = arith.cmpi ne, %1, %c0_i32_0 : i32
    scf.if %2 {
      %c0_220 = arith.constant 0 : index
      %c0_221 = arith.constant 0 : index
      %360 = vector.load %arg5[%c0_220, %c0_221] : memref<64x32xbf16, #tpu.memory_space<vmem>>, vector<64x32xbf16>
      %c0_222 = arith.constant 0 : index
      %c0_223 = arith.constant 0 : index
      %c0_224 = arith.constant 0 : index
      %361 = vector.load %arg3[%c0_222, %c0_223, %c0_224] : memref<1x32x16xbf16, #tpu.memory_space<vmem>>, vector<1x32x16xbf16>
      %362 = vector.shape_cast %361 : vector<1x32x16xbf16> to vector<32x16xbf16>
      %cst_225 = arith.constant dense<0.000000e+00> : vector<64x16xf32>
      %363 = tpu.matmul %360, %362, %cst_225 {dimension_numbers = #tpu.dot_dimension_numbers<[1], [0], [0], [1], [0, 0, 1, 1], [], []>} : vector<64x32xbf16>, vector<32x16xbf16>, vector<64x16xf32> -> vector<64x16xf32>
      %364 = arith.truncf %363 : vector<64x16xf32> to vector<64x16xbf16>
      %c0_226 = arith.constant 0 : index
      %c0_227 = arith.constant 0 : index
      %365 = vector.load %arg15[%c0_226, %c0_227] : memref<64x16xbf16, #tpu.memory_space<vmem>>, vector<64x16xbf16>
      tpu.vector_store %arg15[%c0_226, %c0_227], %364 {strides = array<i32>} : memref<64x16xbf16, #tpu.memory_space<vmem>>, vector<64x16xbf16>,
      %c0_228 = arith.constant 0 : index
      %c0_229 = arith.constant 0 : index
      %c0_230 = arith.constant 0 : index
      %366 = vector.load %arg2[%c0_228, %c0_229, %c0_230] : memref<1x16x32xbf16, #tpu.memory_space<vmem>>, vector<1x16x32xbf16>
      %367 = vector.shape_cast %366 : vector<1x16x32xbf16> to vector<16x32xbf16>
      %c0_231 = arith.constant 0 : index
      %c0_232 = arith.constant 0 : index
      %368 = vector.load %arg6[%c0_231, %c0_232] : memref<32x64xbf16, #tpu.memory_space<vmem>>, vector<32x64xbf16>
      %cst_233 = arith.constant dense<0.000000e+00> : vector<16x64xf32>
      %369 = tpu.matmul %367, %368, %cst_233 {dimension_numbers = #tpu.dot_dimension_numbers<[1], [0], [0], [1], [0, 0, 1, 1], [], []>} : vector<16x32xbf16>, vector<32x64xbf16>, vector<16x64xf32> -> vector<16x64xf32>
      %370 = arith.truncf %369 : vector<16x64xf32> to vector<16x64xbf16>
      %c0_234 = arith.constant 0 : index
      %c0_235 = arith.constant 0 : index
      %371 = vector.load %arg16[%c0_234, %c0_235] : memref<16x64xbf16, #tpu.memory_space<vmem>>, vector<16x64xbf16>
      tpu.vector_store %arg16[%c0_234, %c0_235], %370 {strides = array<i32>} : memref<16x64xbf16, #tpu.memory_space<vmem>>, vector<16x64xbf16>,
    } else {
    }
    %c16_i32 = arith.constant 16 : i32
    %3 = arith.muli %arg1, %c16_i32 : i32
    %4 = tpu.assume_multiple %3, 16 : i32
    %c0 = arith.constant 0 : index
    %5 = arith.index_cast %4 : i32 to index
    %c0_1 = arith.constant 0 : index
    %6 = vector.load %arg2[%c0, %5, %c0_1] : memref<1x16x32xbf16, #tpu.memory_space<vmem>>, vector<1x16x32xbf16>
    %7 = vector.shape_cast %6 : vector<1x16x32xbf16> to vector<16x32xbf16>
    %c0_2 = arith.constant 0 : index
    %c0_3 = arith.constant 0 : index
    %8 = vector.load %arg4[%c0_2, %c0_3] : memref<32x64xbf16, #tpu.memory_space<vmem>>, vector<32x64xbf16>
    %cst = arith.constant dense<0.000000e+00> : vector<16x64xf32>
    %9 = tpu.matmul %7, %8, %cst {dimension_numbers = #tpu.dot_dimension_numbers<[1], [0], [0], [1], [0, 0, 1, 1], [], []>} : vector<16x32xbf16>, vector<32x64xbf16>, vector<16x64xf32> -> vector<16x64xf32>
    %10 = arith.truncf %9 : vector<16x64xf32> to vector<16x64xbf16>
    %c0_4 = arith.constant 0 : index
    %c0_5 = arith.constant 0 : index
    %11 = vector.load %arg17[%c0_4, %c0_5] : memref<16x64xbf16, #tpu.memory_space<vmem>>, vector<16x64xbf16>
    tpu.vector_store %arg17[%c0_4, %c0_5], %10 {strides = array<i32>} : memref<16x64xbf16, #tpu.memory_space<vmem>>, vector<16x64xbf16>,
    %c0_6 = arith.constant 0 : index
    %c0_7 = arith.constant 0 : index
    %12 = vector.load %arg17[%c0_6, %c0_7] : memref<16x64xbf16, #tpu.memory_space<vmem>>, vector<16x16xbf16>
    %c0_8 = arith.constant 0 : index
    %c0_9 = arith.constant 0 : index
    %13 = vector.load %arg15[%c0_8, %c0_9] : memref<64x16xbf16, #tpu.memory_space<vmem>>, vector<16x16xbf16>
    %cst_10 = arith.constant dense<0.000000e+00> : vector<16x16xf32>
    %14 = tpu.matmul %12, %13, %cst_10 {dimension_numbers = #tpu.dot_dimension_numbers<[1], [0], [0], [1], [0, 0, 1, 1], [], []>} : vector<16x16xbf16>, vector<16x16xbf16>, vector<16x16xf32> -> vector<16x16xf32>
    %cst_11 = arith.constant dense<0xFF800000> : vector<16xf32>
    %15 = vector.multi_reduction <maximumf>, %14, %cst_11 [1] : vector<16x16xf32> to vector<16xf32>
    %16 = vector.shape_cast %15 : vector<16xf32> to vector<16x1xf32>
    %17 = vector.broadcast %16 : vector<16x1xf32> to vector<16x16xf32>
    %18 = arith.subf %14, %17 : vector<16x16xf32>
    %19 = math.exp %18 : vector<16x16xf32>
    %cst_12 = arith.constant dense<0.000000e+00> : vector<16xf32>
    %20 = vector.multi_reduction <add>, %19, %cst_12 [1] : vector<16x16xf32> to vector<16xf32>
    %21 = vector.shape_cast %20 : vector<16xf32> to vector<16x1xf32>
    %22 = tpu.reciprocal %21 {approx = true} : vector<16x1xf32> -> vector<16x1xf32>
    %23 = vector.broadcast %22 : vector<16x1xf32> to vector<16x16xf32>
    %24 = arith.mulf %19, %23 : vector<16x16xf32>
    %25 = arith.truncf %24 : vector<16x16xf32> to vector<16x16xbf16>
    %c0_13 = arith.constant 0 : index
    %c0_14 = arith.constant 0 : index
    %c0_15 = arith.constant 0 : index
    %26 = vector.load %arg18[%c0_13, %c0_14, %c0_15] : memref<4x16x16xbf16, #tpu.memory_space<vmem>>, vector<1x16x16xbf16>
    %27 = vector.shape_cast %26 : vector<1x16x16xbf16> to vector<16x16xbf16>
    %28 = vector.shape_cast %25 : vector<16x16xbf16> to vector<1x16x16xbf16>
    tpu.vector_store %arg18[%c0_13, %c0_14, %c0_15], %28 {strides = array<i32>} : memref<4x16x16xbf16, #tpu.memory_space<vmem>>, vector<1x16x16xbf16>,
    %29 = arith.extf %25 : vector<16x16xbf16> to vector<16x16xf32>
    %c0_16 = arith.constant 0 : index
    %30 = memref.load %arg8[%c0_16] : memref<4xf32, #tpu.memory_space<smem>>
    %31 = vector.broadcast %30 : f32 to vector<16x16xf32>
    %32 = arith.mulf %29, %31 : vector<16x16xf32>
    %c0_17 = arith.constant 0 : index
    %c16 = arith.constant 16 : index
    %33 = vector.load %arg17[%c0_17, %c16] : memref<16x64xbf16, #tpu.memory_space<vmem>>, vector<16x16xbf16>
    %c16_18 = arith.constant 16 : index
    %c0_19 = arith.constant 0 : index
    %34 = vector.load %arg15[%c16_18, %c0_19] : memref<64x16xbf16, #tpu.memory_space<vmem>>, vector<16x16xbf16>
    %cst_20 = arith.constant dense<0.000000e+00> : vector<16x16xf32>
    %35 = tpu.matmul %33, %34, %cst_20 {dimension_numbers = #tpu.dot_dimension_numbers<[1], [0], [0], [1], [0, 0, 1, 1], [], []>} : vector<16x16xbf16>, vector<16x16xbf16>, vector<16x16xf32> -> vector<16x16xf32>
    %cst_21 = arith.constant dense<0xFF800000> : vector<16xf32>
    %36 = vector.multi_reduction <maximumf>, %35, %cst_21 [1] : vector<16x16xf32> to vector<16xf32>
    %37 = vector.shape_cast %36 : vector<16xf32> to vector<16x1xf32>
    %38 = vector.broadcast %37 : vector<16x1xf32> to vector<16x16xf32>
    %39 = arith.subf %35, %38 : vector<16x16xf32>
    %40 = math.exp %39 : vector<16x16xf32>
    %cst_22 = arith.constant dense<0.000000e+00> : vector<16xf32>
    %41 = vector.multi_reduction <add>, %40, %cst_22 [1] : vector<16x16xf32> to vector<16xf32>
    %42 = vector.shape_cast %41 : vector<16xf32> to vector<16x1xf32>
    %43 = tpu.reciprocal %42 {approx = true} : vector<16x1xf32> -> vector<16x1xf32>
    %44 = vector.broadcast %43 : vector<16x1xf32> to vector<16x16xf32>
    %45 = arith.mulf %40, %44 : vector<16x16xf32>
    %46 = arith.truncf %45 : vector<16x16xf32> to vector<16x16xbf16>
    %c1 = arith.constant 1 : index
    %c0_23 = arith.constant 0 : index
    %c0_24 = arith.constant 0 : index
    %47 = vector.load %arg18[%c1, %c0_23, %c0_24] : memref<4x16x16xbf16, #tpu.memory_space<vmem>>, vector<1x16x16xbf16>
    %48 = vector.shape_cast %47 : vector<1x16x16xbf16> to vector<16x16xbf16>
    %49 = vector.shape_cast %46 : vector<16x16xbf16> to vector<1x16x16xbf16>
    tpu.vector_store %arg18[%c1, %c0_23, %c0_24], %49 {strides = array<i32>} : memref<4x16x16xbf16, #tpu.memory_space<vmem>>, vector<1x16x16xbf16>,
    %50 = arith.extf %46 : vector<16x16xbf16> to vector<16x16xf32>
    %c1_25 = arith.constant 1 : index
    %51 = memref.load %arg8[%c1_25] : memref<4xf32, #tpu.memory_space<smem>>
    %52 = vector.broadcast %51 : f32 to vector<16x16xf32>
    %53 = arith.mulf %50, %52 : vector<16x16xf32>
    %54 = arith.addf %32, %53 : vector<16x16xf32>
    %c0_26 = arith.constant 0 : index
    %c32 = arith.constant 32 : index
    %55 = vector.load %arg17[%c0_26, %c32] : memref<16x64xbf16, #tpu.memory_space<vmem>>, vector<16x16xbf16>
    %c32_27 = arith.constant 32 : index
    %c0_28 = arith.constant 0 : index
    %56 = vector.load %arg15[%c32_27, %c0_28] : memref<64x16xbf16, #tpu.memory_space<vmem>>, vector<16x16xbf16>
    %cst_29 = arith.constant dense<0.000000e+00> : vector<16x16xf32>
    %57 = tpu.matmul %55, %56, %cst_29 {dimension_numbers = #tpu.dot_dimension_numbers<[1], [0], [0], [1], [0, 0, 1, 1], [], []>} : vector<16x16xbf16>, vector<16x16xbf16>, vector<16x16xf32> -> vector<16x16xf32>
    %cst_30 = arith.constant dense<0xFF800000> : vector<16xf32>
    %58 = vector.multi_reduction <maximumf>, %57, %cst_30 [1] : vector<16x16xf32> to vector<16xf32>
    %59 = vector.shape_cast %58 : vector<16xf32> to vector<16x1xf32>
    %60 = vector.broadcast %59 : vector<16x1xf32> to vector<16x16xf32>
    %61 = arith.subf %57, %60 : vector<16x16xf32>
    %62 = math.exp %61 : vector<16x16xf32>
    %cst_31 = arith.constant dense<0.000000e+00> : vector<16xf32>
    %63 = vector.multi_reduction <add>, %62, %cst_31 [1] : vector<16x16xf32> to vector<16xf32>
    %64 = vector.shape_cast %63 : vector<16xf32> to vector<16x1xf32>
    %65 = tpu.reciprocal %64 {approx = true} : vector<16x1xf32> -> vector<16x1xf32>
    %66 = vector.broadcast %65 : vector<16x1xf32> to vector<16x16xf32>
    %67 = arith.mulf %62, %66 : vector<16x16xf32>
    %68 = arith.truncf %67 : vector<16x16xf32> to vector<16x16xbf16>
    %c2 = arith.constant 2 : index
    %c0_32 = arith.constant 0 : index
    %c0_33 = arith.constant 0 : index
    %69 = vector.load %arg18[%c2, %c0_32, %c0_33] : memref<4x16x16xbf16, #tpu.memory_space<vmem>>, vector<1x16x16xbf16>
    %70 = vector.shape_cast %69 : vector<1x16x16xbf16> to vector<16x16xbf16>
    %71 = vector.shape_cast %68 : vector<16x16xbf16> to vector<1x16x16xbf16>
    tpu.vector_store %arg18[%c2, %c0_32, %c0_33], %71 {strides = array<i32>} : memref<4x16x16xbf16, #tpu.memory_space<vmem>>, vector<1x16x16xbf16>,
    %72 = arith.extf %68 : vector<16x16xbf16> to vector<16x16xf32>
    %c2_34 = arith.constant 2 : index
    %73 = memref.load %arg8[%c2_34] : memref<4xf32, #tpu.memory_space<smem>>
    %74 = vector.broadcast %73 : f32 to vector<16x16xf32>
    %75 = arith.mulf %72, %74 : vector<16x16xf32>
    %76 = arith.addf %54, %75 : vector<16x16xf32>
    %c0_35 = arith.constant 0 : index
    %c48 = arith.constant 48 : index
    %77 = vector.load %arg17[%c0_35, %c48] : memref<16x64xbf16, #tpu.memory_space<vmem>>, vector<16x16xbf16>
    %c48_36 = arith.constant 48 : index
    %c0_37 = arith.constant 0 : index
    %78 = vector.load %arg15[%c48_36, %c0_37] : memref<64x16xbf16, #tpu.memory_space<vmem>>, vector<16x16xbf16>
    %cst_38 = arith.constant dense<0.000000e+00> : vector<16x16xf32>
    %79 = tpu.matmul %77, %78, %cst_38 {dimension_numbers = #tpu.dot_dimension_numbers<[1], [0], [0], [1], [0, 0, 1, 1], [], []>} : vector<16x16xbf16>, vector<16x16xbf16>, vector<16x16xf32> -> vector<16x16xf32>
    %cst_39 = arith.constant dense<0xFF800000> : vector<16xf32>
    %80 = vector.multi_reduction <maximumf>, %79, %cst_39 [1] : vector<16x16xf32> to vector<16xf32>
    %81 = vector.shape_cast %80 : vector<16xf32> to vector<16x1xf32>
    %82 = vector.broadcast %81 : vector<16x1xf32> to vector<16x16xf32>
    %83 = arith.subf %79, %82 : vector<16x16xf32>
    %84 = math.exp %83 : vector<16x16xf32>
    %cst_40 = arith.constant dense<0.000000e+00> : vector<16xf32>
    %85 = vector.multi_reduction <add>, %84, %cst_40 [1] : vector<16x16xf32> to vector<16xf32>
    %86 = vector.shape_cast %85 : vector<16xf32> to vector<16x1xf32>
    %87 = tpu.reciprocal %86 {approx = true} : vector<16x1xf32> -> vector<16x1xf32>
    %88 = vector.broadcast %87 : vector<16x1xf32> to vector<16x16xf32>
    %89 = arith.mulf %84, %88 : vector<16x16xf32>
    %90 = arith.truncf %89 : vector<16x16xf32> to vector<16x16xbf16>
    %c3 = arith.constant 3 : index
    %c0_41 = arith.constant 0 : index
    %c0_42 = arith.constant 0 : index
    %91 = vector.load %arg18[%c3, %c0_41, %c0_42] : memref<4x16x16xbf16, #tpu.memory_space<vmem>>, vector<1x16x16xbf16>
    %92 = vector.shape_cast %91 : vector<1x16x16xbf16> to vector<16x16xbf16>
    %93 = vector.shape_cast %90 : vector<16x16xbf16> to vector<1x16x16xbf16>
    tpu.vector_store %arg18[%c3, %c0_41, %c0_42], %93 {strides = array<i32>} : memref<4x16x16xbf16, #tpu.memory_space<vmem>>, vector<1x16x16xbf16>,
    %94 = arith.extf %90 : vector<16x16xbf16> to vector<16x16xf32>
    %c3_43 = arith.constant 3 : index
    %95 = memref.load %arg8[%c3_43] : memref<4xf32, #tpu.memory_space<smem>>
    %96 = vector.broadcast %95 : f32 to vector<16x16xf32>
    %97 = arith.mulf %94, %96 : vector<16x16xf32>
    %98 = arith.addf %76, %97 : vector<16x16xf32>
    %c0_44 = arith.constant 0 : index
    %c0_45 = arith.constant 0 : index
    %c0_46 = arith.constant 0 : index
    %99 = vector.load %arg18[%c0_44, %c0_45, %c0_46] : memref<4x16x16xbf16, #tpu.memory_space<vmem>>, vector<1x16x16xbf16>
    %100 = vector.shape_cast %99 : vector<1x16x16xbf16> to vector<16x16xbf16>
    %101 = arith.extf %100 : vector<16x16xbf16> to vector<16x16xf32>
    %102 = arith.mulf %101, %101 : vector<16x16xf32>
    %c0_47 = arith.constant 0 : index
    %c0_48 = arith.constant 0 : index
    %103 = memref.load %arg9[%c0_47, %c0_48] : memref<4x4xf32, #tpu.memory_space<smem>>
    %104 = vector.broadcast %103 : f32 to vector<16x16xf32>
    %105 = arith.mulf %102, %104 : vector<16x16xf32>
    %c1_49 = arith.constant 1 : index
    %c0_50 = arith.constant 0 : index
    %c0_51 = arith.constant 0 : index
    %106 = vector.load %arg18[%c1_49, %c0_50, %c0_51] : memref<4x16x16xbf16, #tpu.memory_space<vmem>>, vector<1x16x16xbf16>
    %107 = vector.shape_cast %106 : vector<1x16x16xbf16> to vector<16x16xbf16>
    %108 = arith.extf %107 : vector<16x16xbf16> to vector<16x16xf32>
    %109 = arith.mulf %101, %108 : vector<16x16xf32>
    %c0_52 = arith.constant 0 : index
    %c1_53 = arith.constant 1 : index
    %110 = memref.load %arg9[%c0_52, %c1_53] : memref<4x4xf32, #tpu.memory_space<smem>>
    %cst_54 = arith.constant 2.000000e+00 : f32
    %111 = arith.mulf %cst_54, %110 : f32
    %112 = vector.broadcast %111 : f32 to vector<16x16xf32>
    %113 = arith.mulf %109, %112 : vector<16x16xf32>
    %114 = arith.addf %105, %113 : vector<16x16xf32>
    %c2_55 = arith.constant 2 : index
    %c0_56 = arith.constant 0 : index
    %c0_57 = arith.constant 0 : index
    %115 = vector.load %arg18[%c2_55, %c0_56, %c0_57] : memref<4x16x16xbf16, #tpu.memory_space<vmem>>, vector<1x16x16xbf16>
    %116 = vector.shape_cast %115 : vector<1x16x16xbf16> to vector<16x16xbf16>
    %117 = arith.extf %116 : vector<16x16xbf16> to vector<16x16xf32>
    %118 = arith.mulf %101, %117 : vector<16x16xf32>
    %c0_58 = arith.constant 0 : index
    %c2_59 = arith.constant 2 : index
    %119 = memref.load %arg9[%c0_58, %c2_59] : memref<4x4xf32, #tpu.memory_space<smem>>
    %cst_60 = arith.constant 2.000000e+00 : f32
    %120 = arith.mulf %cst_60, %119 : f32
    %121 = vector.broadcast %120 : f32 to vector<16x16xf32>
    %122 = arith.mulf %118, %121 : vector<16x16xf32>
    %123 = arith.addf %114, %122 : vector<16x16xf32>
    %c3_61 = arith.constant 3 : index
    %c0_62 = arith.constant 0 : index
    %c0_63 = arith.constant 0 : index
    %124 = vector.load %arg18[%c3_61, %c0_62, %c0_63] : memref<4x16x16xbf16, #tpu.memory_space<vmem>>, vector<1x16x16xbf16>
    %125 = vector.shape_cast %124 : vector<1x16x16xbf16> to vector<16x16xbf16>
    %126 = arith.extf %125 : vector<16x16xbf16> to vector<16x16xf32>
    %127 = arith.mulf %101, %126 : vector<16x16xf32>
    %c0_64 = arith.constant 0 : index
    %c3_65 = arith.constant 3 : index
    %128 = memref.load %arg9[%c0_64, %c3_65] : memref<4x4xf32, #tpu.memory_space<smem>>
    %cst_66 = arith.constant 2.000000e+00 : f32
    %129 = arith.mulf %cst_66, %128 : f32
    %130 = vector.broadcast %129 : f32 to vector<16x16xf32>
    %131 = arith.mulf %127, %130 : vector<16x16xf32>
    %132 = arith.addf %123, %131 : vector<16x16xf32>
    %c1_67 = arith.constant 1 : index
    %c0_68 = arith.constant 0 : index
    %c0_69 = arith.constant 0 : index
    %133 = vector.load %arg18[%c1_67, %c0_68, %c0_69] : memref<4x16x16xbf16, #tpu.memory_space<vmem>>, vector<1x16x16xbf16>
    %134 = vector.shape_cast %133 : vector<1x16x16xbf16> to vector<16x16xbf16>
    %135 = arith.extf %134 : vector<16x16xbf16> to vector<16x16xf32>
    %136 = arith.mulf %135, %135 : vector<16x16xf32>
    %c1_70 = arith.constant 1 : index
    %c1_71 = arith.constant 1 : index
    %137 = memref.load %arg9[%c1_70, %c1_71] : memref<4x4xf32, #tpu.memory_space<smem>>
    %138 = vector.broadcast %137 : f32 to vector<16x16xf32>
    %139 = arith.mulf %136, %138 : vector<16x16xf32>
    %140 = arith.addf %132, %139 : vector<16x16xf32>
    %c2_72 = arith.constant 2 : index
    %c0_73 = arith.constant 0 : index
    %c0_74 = arith.constant 0 : index
    %141 = vector.load %arg18[%c2_72, %c0_73, %c0_74] : memref<4x16x16xbf16, #tpu.memory_space<vmem>>, vector<1x16x16xbf16>
    %142 = vector.shape_cast %141 : vector<1x16x16xbf16> to vector<16x16xbf16>
    %143 = arith.extf %142 : vector<16x16xbf16> to vector<16x16xf32>
    %144 = arith.mulf %135, %143 : vector<16x16xf32>
    %c1_75 = arith.constant 1 : index
    %c2_76 = arith.constant 2 : index
    %145 = memref.load %arg9[%c1_75, %c2_76] : memref<4x4xf32, #tpu.memory_space<smem>>
    %cst_77 = arith.constant 2.000000e+00 : f32
    %146 = arith.mulf %cst_77, %145 : f32
    %147 = vector.broadcast %146 : f32 to vector<16x16xf32>
    %148 = arith.mulf %144, %147 : vector<16x16xf32>
    %149 = arith.addf %140, %148 : vector<16x16xf32>
    %c3_78 = arith.constant 3 : index
    %c0_79 = arith.constant 0 : index
    %c0_80 = arith.constant 0 : index
    %150 = vector.load %arg18[%c3_78, %c0_79, %c0_80] : memref<4x16x16xbf16, #tpu.memory_space<vmem>>, vector<1x16x16xbf16>
    %151 = vector.shape_cast %150 : vector<1x16x16xbf16> to vector<16x16xbf16>
    %152 = arith.extf %151 : vector<16x16xbf16> to vector<16x16xf32>
    %153 = arith.mulf %135, %152 : vector<16x16xf32>
    %c1_81 = arith.constant 1 : index
    %c3_82 = arith.constant 3 : index
    %154 = memref.load %arg9[%c1_81, %c3_82] : memref<4x4xf32, #tpu.memory_space<smem>>
    %cst_83 = arith.constant 2.000000e+00 : f32
    %155 = arith.mulf %cst_83, %154 : f32
    %156 = vector.broadcast %155 : f32 to vector<16x16xf32>
    %157 = arith.mulf %153, %156 : vector<16x16xf32>
    %158 = arith.addf %149, %157 : vector<16x16xf32>
    %c2_84 = arith.constant 2 : index
    %c0_85 = arith.constant 0 : index
    %c0_86 = arith.constant 0 : index
    %159 = vector.load %arg18[%c2_84, %c0_85, %c0_86] : memref<4x16x16xbf16, #tpu.memory_space<vmem>>, vector<1x16x16xbf16>
    %160 = vector.shape_cast %159 : vector<1x16x16xbf16> to vector<16x16xbf16>
    %161 = arith.extf %160 : vector<16x16xbf16> to vector<16x16xf32>
    %162 = arith.mulf %161, %161 : vector<16x16xf32>
    %c2_87 = arith.constant 2 : index
    %c2_88 = arith.constant 2 : index
    %163 = memref.load %arg9[%c2_87, %c2_88] : memref<4x4xf32, #tpu.memory_space<smem>>
    %164 = vector.broadcast %163 : f32 to vector<16x16xf32>
    %165 = arith.mulf %162, %164 : vector<16x16xf32>
    %166 = arith.addf %158, %165 : vector<16x16xf32>
    %c3_89 = arith.constant 3 : index
    %c0_90 = arith.constant 0 : index
    %c0_91 = arith.constant 0 : index
    %167 = vector.load %arg18[%c3_89, %c0_90, %c0_91] : memref<4x16x16xbf16, #tpu.memory_space<vmem>>, vector<1x16x16xbf16>
    %168 = vector.shape_cast %167 : vector<1x16x16xbf16> to vector<16x16xbf16>
    %169 = arith.extf %168 : vector<16x16xbf16> to vector<16x16xf32>
    %170 = arith.mulf %161, %169 : vector<16x16xf32>
    %c2_92 = arith.constant 2 : index
    %c3_93 = arith.constant 3 : index
    %171 = memref.load %arg9[%c2_92, %c3_93] : memref<4x4xf32, #tpu.memory_space<smem>>
    %cst_94 = arith.constant 2.000000e+00 : f32
    %172 = arith.mulf %cst_94, %171 : f32
    %173 = vector.broadcast %172 : f32 to vector<16x16xf32>
    %174 = arith.mulf %170, %173 : vector<16x16xf32>
    %175 = arith.addf %166, %174 : vector<16x16xf32>
    %c3_95 = arith.constant 3 : index
    %c0_96 = arith.constant 0 : index
    %c0_97 = arith.constant 0 : index
    %176 = vector.load %arg18[%c3_95, %c0_96, %c0_97] : memref<4x16x16xbf16, #tpu.memory_space<vmem>>, vector<1x16x16xbf16>
    %177 = vector.shape_cast %176 : vector<1x16x16xbf16> to vector<16x16xbf16>
    %178 = arith.extf %177 : vector<16x16xbf16> to vector<16x16xf32>
    %179 = arith.mulf %178, %178 : vector<16x16xf32>
    %c3_98 = arith.constant 3 : index
    %c3_99 = arith.constant 3 : index
    %180 = memref.load %arg9[%c3_98, %c3_99] : memref<4x4xf32, #tpu.memory_space<smem>>
    %181 = vector.broadcast %180 : f32 to vector<16x16xf32>
    %182 = arith.mulf %179, %181 : vector<16x16xf32>
    %183 = arith.addf %175, %182 : vector<16x16xf32>
    %184 = arith.mulf %98, %98 : vector<16x16xf32>
    %185 = arith.subf %183, %184 : vector<16x16xf32>
    %cst_100 = arith.constant 0.000000e+00 : f32
    %186 = vector.broadcast %cst_100 : f32 to vector<16x16xf32>
    %187 = arith.maximumf %185, %186 : vector<16x16xf32>
    %cst_101 = arith.constant 9.99999974E-6 : f32
    %188 = vector.broadcast %cst_101 : f32 to vector<16x16xf32>
    %189 = arith.addf %187, %188 : vector<16x16xf32>
    %190 = math.rsqrt %189 : vector<16x16xf32>
    %c0_102 = arith.constant 0 : index
    %c0_103 = arith.constant 0 : index
    %c0_104 = arith.constant 0 : index
    %191 = vector.load %arg18[%c0_102, %c0_103, %c0_104] : memref<4x16x16xbf16, #tpu.memory_space<vmem>>, vector<1x16x16xbf16>
    %192 = vector.shape_cast %191 : vector<1x16x16xbf16> to vector<16x16xbf16>
    %193 = arith.extf %192 : vector<16x16xbf16> to vector<16x16xf32>
    %c0_105 = arith.constant 0 : index
    %c0_106 = arith.constant 0 : index
    %194 = memref.load %arg7[%c0_105, %c0_106] : memref<4x4xf32, #tpu.memory_space<smem>>
    %195 = vector.broadcast %194 : f32 to vector<16x16xf32>
    %196 = arith.mulf %193, %195 : vector<16x16xf32>
    %c1_107 = arith.constant 1 : index
    %c0_108 = arith.constant 0 : index
    %c0_109 = arith.constant 0 : index
    %197 = vector.load %arg18[%c1_107, %c0_108, %c0_109] : memref<4x16x16xbf16, #tpu.memory_space<vmem>>, vector<1x16x16xbf16>
    %198 = vector.shape_cast %197 : vector<1x16x16xbf16> to vector<16x16xbf16>
    %199 = arith.extf %198 : vector<16x16xbf16> to vector<16x16xf32>
    %c1_110 = arith.constant 1 : index
    %c0_111 = arith.constant 0 : index
    %200 = memref.load %arg7[%c1_110, %c0_111] : memref<4x4xf32, #tpu.memory_space<smem>>
    %201 = vector.broadcast %200 : f32 to vector<16x16xf32>
    %202 = arith.mulf %199, %201 : vector<16x16xf32>
    %203 = arith.addf %196, %202 : vector<16x16xf32>
    %c2_112 = arith.constant 2 : index
    %c0_113 = arith.constant 0 : index
    %c0_114 = arith.constant 0 : index
    %204 = vector.load %arg18[%c2_112, %c0_113, %c0_114] : memref<4x16x16xbf16, #tpu.memory_space<vmem>>, vector<1x16x16xbf16>
    %205 = vector.shape_cast %204 : vector<1x16x16xbf16> to vector<16x16xbf16>
    %206 = arith.extf %205 : vector<16x16xbf16> to vector<16x16xf32>
    %c2_115 = arith.constant 2 : index
    %c0_116 = arith.constant 0 : index
    %207 = memref.load %arg7[%c2_115, %c0_116] : memref<4x4xf32, #tpu.memory_space<smem>>
    %208 = vector.broadcast %207 : f32 to vector<16x16xf32>
    %209 = arith.mulf %206, %208 : vector<16x16xf32>
    %210 = arith.addf %203, %209 : vector<16x16xf32>
    %c3_117 = arith.constant 3 : index
    %c0_118 = arith.constant 0 : index
    %c0_119 = arith.constant 0 : index
    %211 = vector.load %arg18[%c3_117, %c0_118, %c0_119] : memref<4x16x16xbf16, #tpu.memory_space<vmem>>, vector<1x16x16xbf16>
    %212 = vector.shape_cast %211 : vector<1x16x16xbf16> to vector<16x16xbf16>
    %213 = arith.extf %212 : vector<16x16xbf16> to vector<16x16xf32>
    %c3_120 = arith.constant 3 : index
    %c0_121 = arith.constant 0 : index
    %214 = memref.load %arg7[%c3_120, %c0_121] : memref<4x4xf32, #tpu.memory_space<smem>>
    %215 = vector.broadcast %214 : f32 to vector<16x16xf32>
    %216 = arith.mulf %213, %215 : vector<16x16xf32>
    %217 = arith.addf %210, %216 : vector<16x16xf32>
    %218 = arith.subf %217, %98 : vector<16x16xf32>
    %219 = arith.mulf %218, %190 : vector<16x16xf32>
    %c0_122 = arith.constant 0 : index
    %220 = memref.load %arg10[%c0_122] : memref<4xf32, #tpu.memory_space<smem>>
    %221 = vector.broadcast %220 : f32 to vector<16x16xf32>
    %222 = arith.mulf %219, %221 : vector<16x16xf32>
    %c0_123 = arith.constant 0 : index
    %223 = memref.load %arg11[%c0_123] : memref<4xf32, #tpu.memory_space<smem>>
    %224 = vector.broadcast %223 : f32 to vector<16x16xf32>
    %225 = arith.addf %222, %224 : vector<16x16xf32>
    %226 = arith.truncf %225 : vector<16x16xf32> to vector<16x16xbf16>
    %c0_124 = arith.constant 0 : index
    %c0_125 = arith.constant 0 : index
    %227 = vector.load %arg16[%c0_124, %c0_125] : memref<16x64xbf16, #tpu.memory_space<vmem>>, vector<16x16xbf16>
    %cst_126 = arith.constant dense<0.000000e+00> : vector<16x16xf32>
    %228 = tpu.matmul %226, %227, %cst_126 {dimension_numbers = #tpu.dot_dimension_numbers<[1], [0], [0], [1], [0, 0, 1, 1], [], []>} : vector<16x16xbf16>, vector<16x16xbf16>, vector<16x16xf32> -> vector<16x16xf32>
    %229 = arith.truncf %228 : vector<16x16xf32> to vector<16x16xbf16>
    %c0_127 = arith.constant 0 : index
    %c0_128 = arith.constant 0 : index
    %230 = vector.load %arg19[%c0_127, %c0_128] : memref<16x64xbf16, #tpu.memory_space<vmem>>, vector<16x16xbf16>
    tpu.vector_store %arg19[%c0_127, %c0_128], %229 {strides = array<i32>} : memref<16x64xbf16, #tpu.memory_space<vmem>>, vector<16x16xbf16>,
    %c0_129 = arith.constant 0 : index
    %c0_130 = arith.constant 0 : index
    %c0_131 = arith.constant 0 : index
    %231 = vector.load %arg18[%c0_129, %c0_130, %c0_131] : memref<4x16x16xbf16, #tpu.memory_space<vmem>>, vector<1x16x16xbf16>
    %232 = vector.shape_cast %231 : vector<1x16x16xbf16> to vector<16x16xbf16>
    %233 = arith.extf %232 : vector<16x16xbf16> to vector<16x16xf32>
    %c0_132 = arith.constant 0 : index
    %c1_133 = arith.constant 1 : index
    %234 = memref.load %arg7[%c0_132, %c1_133] : memref<4x4xf32, #tpu.memory_space<smem>>
    %235 = vector.broadcast %234 : f32 to vector<16x16xf32>
    %236 = arith.mulf %233, %235 : vector<16x16xf32>
    %c1_134 = arith.constant 1 : index
    %c0_135 = arith.constant 0 : index
    %c0_136 = arith.constant 0 : index
    %237 = vector.load %arg18[%c1_134, %c0_135, %c0_136] : memref<4x16x16xbf16, #tpu.memory_space<vmem>>, vector<1x16x16xbf16>
    %238 = vector.shape_cast %237 : vector<1x16x16xbf16> to vector<16x16xbf16>
    %239 = arith.extf %238 : vector<16x16xbf16> to vector<16x16xf32>
    %c1_137 = arith.constant 1 : index
    %c1_138 = arith.constant 1 : index
    %240 = memref.load %arg7[%c1_137, %c1_138] : memref<4x4xf32, #tpu.memory_space<smem>>
    %241 = vector.broadcast %240 : f32 to vector<16x16xf32>
    %242 = arith.mulf %239, %241 : vector<16x16xf32>
    %243 = arith.addf %236, %242 : vector<16x16xf32>
    %c2_139 = arith.constant 2 : index
    %c0_140 = arith.constant 0 : index
    %c0_141 = arith.constant 0 : index
    %244 = vector.load %arg18[%c2_139, %c0_140, %c0_141] : memref<4x16x16xbf16, #tpu.memory_space<vmem>>, vector<1x16x16xbf16>
    %245 = vector.shape_cast %244 : vector<1x16x16xbf16> to vector<16x16xbf16>
    %246 = arith.extf %245 : vector<16x16xbf16> to vector<16x16xf32>
    %c2_142 = arith.constant 2 : index
    %c1_143 = arith.constant 1 : index
    %247 = memref.load %arg7[%c2_142, %c1_143] : memref<4x4xf32, #tpu.memory_space<smem>>
    %248 = vector.broadcast %247 : f32 to vector<16x16xf32>
    %249 = arith.mulf %246, %248 : vector<16x16xf32>
    %250 = arith.addf %243, %249 : vector<16x16xf32>
    %c3_144 = arith.constant 3 : index
    %c0_145 = arith.constant 0 : index
    %c0_146 = arith.constant 0 : index
    %251 = vector.load %arg18[%c3_144, %c0_145, %c0_146] : memref<4x16x16xbf16, #tpu.memory_space<vmem>>, vector<1x16x16xbf16>
    %252 = vector.shape_cast %251 : vector<1x16x16xbf16> to vector<16x16xbf16>
    %253 = arith.extf %252 : vector<16x16xbf16> to vector<16x16xf32>
    %c3_147 = arith.constant 3 : index
    %c1_148 = arith.constant 1 : index
    %254 = memref.load %arg7[%c3_147, %c1_148] : memref<4x4xf32, #tpu.memory_space<smem>>
    %255 = vector.broadcast %254 : f32 to vector<16x16xf32>
    %256 = arith.mulf %253, %255 : vector<16x16xf32>
    %257 = arith.addf %250, %256 : vector<16x16xf32>
    %258 = arith.subf %257, %98 : vector<16x16xf32>
    %259 = arith.mulf %258, %190 : vector<16x16xf32>
    %c1_149 = arith.constant 1 : index
    %260 = memref.load %arg10[%c1_149] : memref<4xf32, #tpu.memory_space<smem>>
    %261 = vector.broadcast %260 : f32 to vector<16x16xf32>
    %262 = arith.mulf %259, %261 : vector<16x16xf32>
    %c1_150 = arith.constant 1 : index
    %263 = memref.load %arg11[%c1_150] : memref<4xf32, #tpu.memory_space<smem>>
    %264 = vector.broadcast %263 : f32 to vector<16x16xf32>
    %265 = arith.addf %262, %264 : vector<16x16xf32>
    %266 = arith.truncf %265 : vector<16x16xf32> to vector<16x16xbf16>
    %c0_151 = arith.constant 0 : index
    %c16_152 = arith.constant 16 : index
    %267 = vector.load %arg16[%c0_151, %c16_152] : memref<16x64xbf16, #tpu.memory_space<vmem>>, vector<16x16xbf16>
    %cst_153 = arith.constant dense<0.000000e+00> : vector<16x16xf32>
    %268 = tpu.matmul %266, %267, %cst_153 {dimension_numbers = #tpu.dot_dimension_numbers<[1], [0], [0], [1], [0, 0, 1, 1], [], []>} : vector<16x16xbf16>, vector<16x16xbf16>, vector<16x16xf32> -> vector<16x16xf32>
    %269 = arith.truncf %268 : vector<16x16xf32> to vector<16x16xbf16>
    %c0_154 = arith.constant 0 : index
    %c16_155 = arith.constant 16 : index
    %270 = vector.load %arg19[%c0_154, %c16_155] : memref<16x64xbf16, #tpu.memory_space<vmem>>, vector<16x16xbf16>
    tpu.vector_store %arg19[%c0_154, %c16_155], %269 {strides = array<i32>} : memref<16x64xbf16, #tpu.memory_space<vmem>>, vector<16x16xbf16>,
    %c0_156 = arith.constant 0 : index
    %c0_157 = arith.constant 0 : index
    %c0_158 = arith.constant 0 : index
    %271 = vector.load %arg18[%c0_156, %c0_157, %c0_158] : memref<4x16x16xbf16, #tpu.memory_space<vmem>>, vector<1x16x16xbf16>
    %272 = vector.shape_cast %271 : vector<1x16x16xbf16> to vector<16x16xbf16>
    %273 = arith.extf %272 : vector<16x16xbf16> to vector<16x16xf32>
    %c0_159 = arith.constant 0 : index
    %c2_160 = arith.constant 2 : index
    %274 = memref.load %arg7[%c0_159, %c2_160] : memref<4x4xf32, #tpu.memory_space<smem>>
    %275 = vector.broadcast %274 : f32 to vector<16x16xf32>
    %276 = arith.mulf %273, %275 : vector<16x16xf32>
    %c1_161 = arith.constant 1 : index
    %c0_162 = arith.constant 0 : index
    %c0_163 = arith.constant 0 : index
    %277 = vector.load %arg18[%c1_161, %c0_162, %c0_163] : memref<4x16x16xbf16, #tpu.memory_space<vmem>>, vector<1x16x16xbf16>
    %278 = vector.shape_cast %277 : vector<1x16x16xbf16> to vector<16x16xbf16>
    %279 = arith.extf %278 : vector<16x16xbf16> to vector<16x16xf32>
    %c1_164 = arith.constant 1 : index
    %c2_165 = arith.constant 2 : index
    %280 = memref.load %arg7[%c1_164, %c2_165] : memref<4x4xf32, #tpu.memory_space<smem>>
    %281 = vector.broadcast %280 : f32 to vector<16x16xf32>
    %282 = arith.mulf %279, %281 : vector<16x16xf32>
    %283 = arith.addf %276, %282 : vector<16x16xf32>
    %c2_166 = arith.constant 2 : index
    %c0_167 = arith.constant 0 : index
    %c0_168 = arith.constant 0 : index
    %284 = vector.load %arg18[%c2_166, %c0_167, %c0_168] : memref<4x16x16xbf16, #tpu.memory_space<vmem>>, vector<1x16x16xbf16>
    %285 = vector.shape_cast %284 : vector<1x16x16xbf16> to vector<16x16xbf16>
    %286 = arith.extf %285 : vector<16x16xbf16> to vector<16x16xf32>
    %c2_169 = arith.constant 2 : index
    %c2_170 = arith.constant 2 : index
    %287 = memref.load %arg7[%c2_169, %c2_170] : memref<4x4xf32, #tpu.memory_space<smem>>
    %288 = vector.broadcast %287 : f32 to vector<16x16xf32>
    %289 = arith.mulf %286, %288 : vector<16x16xf32>
    %290 = arith.addf %283, %289 : vector<16x16xf32>
    %c3_171 = arith.constant 3 : index
    %c0_172 = arith.constant 0 : index
    %c0_173 = arith.constant 0 : index
    %291 = vector.load %arg18[%c3_171, %c0_172, %c0_173] : memref<4x16x16xbf16, #tpu.memory_space<vmem>>, vector<1x16x16xbf16>
    %292 = vector.shape_cast %291 : vector<1x16x16xbf16> to vector<16x16xbf16>
    %293 = arith.extf %292 : vector<16x16xbf16> to vector<16x16xf32>
    %c3_174 = arith.constant 3 : index
    %c2_175 = arith.constant 2 : index
    %294 = memref.load %arg7[%c3_174, %c2_175] : memref<4x4xf32, #tpu.memory_space<smem>>
    %295 = vector.broadcast %294 : f32 to vector<16x16xf32>
    %296 = arith.mulf %293, %295 : vector<16x16xf32>
    %297 = arith.addf %290, %296 : vector<16x16xf32>
    %298 = arith.subf %297, %98 : vector<16x16xf32>
    %299 = arith.mulf %298, %190 : vector<16x16xf32>
    %c2_176 = arith.constant 2 : index
    %300 = memref.load %arg10[%c2_176] : memref<4xf32, #tpu.memory_space<smem>>
    %301 = vector.broadcast %300 : f32 to vector<16x16xf32>
    %302 = arith.mulf %299, %301 : vector<16x16xf32>
    %c2_177 = arith.constant 2 : index
    %303 = memref.load %arg11[%c2_177] : memref<4xf32, #tpu.memory_space<smem>>
    %304 = vector.broadcast %303 : f32 to vector<16x16xf32>
    %305 = arith.addf %302, %304 : vector<16x16xf32>
    %306 = arith.truncf %305 : vector<16x16xf32> to vector<16x16xbf16>
    %c0_178 = arith.constant 0 : index
    %c32_179 = arith.constant 32 : index
    %307 = vector.load %arg16[%c0_178, %c32_179] : memref<16x64xbf16, #tpu.memory_space<vmem>>, vector<16x16xbf16>
    %cst_180 = arith.constant dense<0.000000e+00> : vector<16x16xf32>
    %308 = tpu.matmul %306, %307, %cst_180 {dimension_numbers = #tpu.dot_dimension_numbers<[1], [0], [0], [1], [0, 0, 1, 1], [], []>} : vector<16x16xbf16>, vector<16x16xbf16>, vector<16x16xf32> -> vector<16x16xf32>
    %309 = arith.truncf %308 : vector<16x16xf32> to vector<16x16xbf16>
    %c0_181 = arith.constant 0 : index
    %c32_182 = arith.constant 32 : index
    %310 = vector.load %arg19[%c0_181, %c32_182] : memref<16x64xbf16, #tpu.memory_space<vmem>>, vector<16x16xbf16>
    tpu.vector_store %arg19[%c0_181, %c32_182], %309 {strides = array<i32>} : memref<16x64xbf16, #tpu.memory_space<vmem>>, vector<16x16xbf16>,
    %c0_183 = arith.constant 0 : index
    %c0_184 = arith.constant 0 : index
    %c0_185 = arith.constant 0 : index
    %311 = vector.load %arg18[%c0_183, %c0_184, %c0_185] : memref<4x16x16xbf16, #tpu.memory_space<vmem>>, vector<1x16x16xbf16>
    %312 = vector.shape_cast %311 : vector<1x16x16xbf16> to vector<16x16xbf16>
    %313 = arith.extf %312 : vector<16x16xbf16> to vector<16x16xf32>
    %c0_186 = arith.constant 0 : index
    %c3_187 = arith.constant 3 : index
    %314 = memref.load %arg7[%c0_186, %c3_187] : memref<4x4xf32, #tpu.memory_space<smem>>
    %315 = vector.broadcast %314 : f32 to vector<16x16xf32>
    %316 = arith.mulf %313, %315 : vector<16x16xf32>
    %c1_188 = arith.constant 1 : index
    %c0_189 = arith.constant 0 : index
    %c0_190 = arith.constant 0 : index
    %317 = vector.load %arg18[%c1_188, %c0_189, %c0_190] : memref<4x16x16xbf16, #tpu.memory_space<vmem>>, vector<1x16x16xbf16>
    %318 = vector.shape_cast %317 : vector<1x16x16xbf16> to vector<16x16xbf16>
    %319 = arith.extf %318 : vector<16x16xbf16> to vector<16x16xf32>
    %c1_191 = arith.constant 1 : index
    %c3_192 = arith.constant 3 : index
    %320 = memref.load %arg7[%c1_191, %c3_192] : memref<4x4xf32, #tpu.memory_space<smem>>
    %321 = vector.broadcast %320 : f32 to vector<16x16xf32>
    %322 = arith.mulf %319, %321 : vector<16x16xf32>
    %323 = arith.addf %316, %322 : vector<16x16xf32>
    %c2_193 = arith.constant 2 : index
    %c0_194 = arith.constant 0 : index
    %c0_195 = arith.constant 0 : index
    %324 = vector.load %arg18[%c2_193, %c0_194, %c0_195] : memref<4x16x16xbf16, #tpu.memory_space<vmem>>, vector<1x16x16xbf16>
    %325 = vector.shape_cast %324 : vector<1x16x16xbf16> to vector<16x16xbf16>
    %326 = arith.extf %325 : vector<16x16xbf16> to vector<16x16xf32>
    %c2_196 = arith.constant 2 : index
    %c3_197 = arith.constant 3 : index
    %327 = memref.load %arg7[%c2_196, %c3_197] : memref<4x4xf32, #tpu.memory_space<smem>>
    %328 = vector.broadcast %327 : f32 to vector<16x16xf32>
    %329 = arith.mulf %326, %328 : vector<16x16xf32>
    %330 = arith.addf %323, %329 : vector<16x16xf32>
    %c3_198 = arith.constant 3 : index
    %c0_199 = arith.constant 0 : index
    %c0_200 = arith.constant 0 : index
    %331 = vector.load %arg18[%c3_198, %c0_199, %c0_200] : memref<4x16x16xbf16, #tpu.memory_space<vmem>>, vector<1x16x16xbf16>
    %332 = vector.shape_cast %331 : vector<1x16x16xbf16> to vector<16x16xbf16>
    %333 = arith.extf %332 : vector<16x16xbf16> to vector<16x16xf32>
    %c3_201 = arith.constant 3 : index
    %c3_202 = arith.constant 3 : index
    %334 = memref.load %arg7[%c3_201, %c3_202] : memref<4x4xf32, #tpu.memory_space<smem>>
    %335 = vector.broadcast %334 : f32 to vector<16x16xf32>
    %336 = arith.mulf %333, %335 : vector<16x16xf32>
    %337 = arith.addf %330, %336 : vector<16x16xf32>
    %338 = arith.subf %337, %98 : vector<16x16xf32>
    %339 = arith.mulf %338, %190 : vector<16x16xf32>
    %c3_203 = arith.constant 3 : index
    %340 = memref.load %arg10[%c3_203] : memref<4xf32, #tpu.memory_space<smem>>
    %341 = vector.broadcast %340 : f32 to vector<16x16xf32>
    %342 = arith.mulf %339, %341 : vector<16x16xf32>
    %c3_204 = arith.constant 3 : index
    %343 = memref.load %arg11[%c3_204] : memref<4xf32, #tpu.memory_space<smem>>
    %344 = vector.broadcast %343 : f32 to vector<16x16xf32>
    %345 = arith.addf %342, %344 : vector<16x16xf32>
    %346 = arith.truncf %345 : vector<16x16xf32> to vector<16x16xbf16>
    %c0_205 = arith.constant 0 : index
    %c48_206 = arith.constant 48 : index
    %347 = vector.load %arg16[%c0_205, %c48_206] : memref<16x64xbf16, #tpu.memory_space<vmem>>, vector<16x16xbf16>
    %cst_207 = arith.constant dense<0.000000e+00> : vector<16x16xf32>
    %348 = tpu.matmul %346, %347, %cst_207 {dimension_numbers = #tpu.dot_dimension_numbers<[1], [0], [0], [1], [0, 0, 1, 1], [], []>} : vector<16x16xbf16>, vector<16x16xbf16>, vector<16x16xf32> -> vector<16x16xf32>
    %349 = arith.truncf %348 : vector<16x16xf32> to vector<16x16xbf16>
    %c0_208 = arith.constant 0 : index
    %c48_209 = arith.constant 48 : index
    %350 = vector.load %arg19[%c0_208, %c48_209] : memref<16x64xbf16, #tpu.memory_space<vmem>>, vector<16x16xbf16>
    tpu.vector_store %arg19[%c0_208, %c48_209], %349 {strides = array<i32>} : memref<16x64xbf16, #tpu.memory_space<vmem>>, vector<16x16xbf16>,
    %c0_210 = arith.constant 0 : index
    %c0_211 = arith.constant 0 : index
    %351 = vector.load %arg19[%c0_210, %c0_211] : memref<16x64xbf16, #tpu.memory_space<vmem>>, vector<16x64xbf16>
    %c0_212 = arith.constant 0 : index
    %c0_213 = arith.constant 0 : index
    %352 = vector.load %arg12[%c0_212, %c0_213] : memref<64x32xbf16, #tpu.memory_space<vmem>>, vector<64x32xbf16>
    %cst_214 = arith.constant dense<0.000000e+00> : vector<16x32xf32>
    %353 = tpu.matmul %351, %352, %cst_214 {dimension_numbers = #tpu.dot_dimension_numbers<[1], [0], [0], [1], [0, 0, 1, 1], [], []>} : vector<16x64xbf16>, vector<64x32xbf16>, vector<16x32xf32> -> vector<16x32xf32>
    %c0_215 = arith.constant 0 : index
    %c0_216 = arith.constant 0 : index
    %354 = vector.load %arg13[%c0_215, %c0_216] : memref<1x32xf32, #tpu.memory_space<vmem>>, vector<1x32xf32>
    %355 = vector.broadcast %354 : vector<1x32xf32> to vector<16x32xf32>
    %356 = arith.addf %353, %355 : vector<16x32xf32>
    %c0_217 = arith.constant 0 : index
    %c0_218 = arith.constant 0 : index
    %c0_219 = arith.constant 0 : index
    %357 = vector.load %arg14[%c0_217, %c0_218, %c0_219] : memref<1x16x32xf32, #tpu.memory_space<vmem>>, vector<1x16x32xf32>
    %358 = vector.shape_cast %357 : vector<1x16x32xf32> to vector<16x32xf32>
    %359 = vector.shape_cast %356 : vector<16x32xf32> to vector<1x16x32xf32>
    tpu.vector_store %arg14[%c0_217, %c0_218, %c0_219], %359 {strides = array<i32>} : memref<1x16x32xf32, #tpu.memory_space<vmem>>, vector<1x16x32xf32>,
    return
  }
  func.func @transform_0(%arg0: i32, %arg1: i32) -> (i32, i32, i32) {
    %c0_i32 = arith.constant 0 : i32
    %c0_i32_0 = arith.constant 0 : i32
    %c0_i32_1 = arith.constant 0 : i32
    return %arg0, %c0_i32, %c0_i32_0 : i32, i32, i32
  }
  func.func @transform_1(%arg0: i32, %arg1: i32) -> (i32, i32, i32) {
    %c0_i32 = arith.constant 0 : i32
    %c0_i32_0 = arith.constant 0 : i32
    %c0_i32_1 = arith.constant 0 : i32
    return %arg0, %c0_i32, %c0_i32_0 : i32, i32, i32
  }
  func.func @transform_2(%arg0: i32, %arg1: i32) -> (i32, i32) {
    %c0_i32 = arith.constant 0 : i32
    %c0_i32_0 = arith.constant 0 : i32
    %c0_i32_1 = arith.constant 0 : i32
    return %c0_i32, %c0_i32_0 : i32, i32
  }
  func.func @transform_3(%arg0: i32, %arg1: i32) -> (i32, i32) {
    %c0_i32 = arith.constant 0 : i32
    %c0_i32_0 = arith.constant 0 : i32
    %c0_i32_1 = arith.constant 0 : i32
    return %c0_i32, %c0_i32_0 : i32, i32
  }
  func.func @transform_4(%arg0: i32, %arg1: i32) -> (i32, i32) {
    %c0_i32 = arith.constant 0 : i32
    %c0_i32_0 = arith.constant 0 : i32
    %c0_i32_1 = arith.constant 0 : i32
    return %c0_i32, %c0_i32_0 : i32, i32
  }
  func.func @transform_5(%arg0: i32, %arg1: i32) -> (i32, i32) {
    %c0_i32 = arith.constant 0 : i32
    %c0_i32_0 = arith.constant 0 : i32
    %c0_i32_1 = arith.constant 0 : i32
    return %c0_i32, %c0_i32_0 : i32, i32
  }
  func.func @transform_6(%arg0: i32, %arg1: i32) -> i32 {
    %c0_i32 = arith.constant 0 : i32
    %c0_i32_0 = arith.constant 0 : i32
    return %c0_i32 : i32
  }
  func.func @transform_7(%arg0: i32, %arg1: i32) -> (i32, i32) {
    %c0_i32 = arith.constant 0 : i32
    %c0_i32_0 = arith.constant 0 : i32
    %c0_i32_1 = arith.constant 0 : i32
    return %c0_i32, %c0_i32_0 : i32, i32
  }
  func.func @transform_8(%arg0: i32, %arg1: i32) -> i32 {
    %c0_i32 = arith.constant 0 : i32
    %c0_i32_0 = arith.constant 0 : i32
    return %c0_i32 : i32
  }
  func.func @transform_9(%arg0: i32, %arg1: i32) -> i32 {
    %c0_i32 = arith.constant 0 : i32
    %c0_i32_0 = arith.constant 0 : i32
    return %c0_i32 : i32
  }
  func.func @transform_10(%arg0: i32, %arg1: i32) -> (i32, i32) {
    %c0_i32 = arith.constant 0 : i32
    %c0_i32_0 = arith.constant 0 : i32
    %c0_i32_1 = arith.constant 0 : i32
    return %c0_i32, %c0_i32_0 : i32, i32
  }
  func.func @transform_11(%arg0: i32, %arg1: i32) -> (i32, i32) {
    %c0_i32 = arith.constant 0 : i32
    %c0_i32_0 = arith.constant 0 : i32
    %c0_i32_1 = arith.constant 0 : i32
    return %c0_i32, %c0_i32_0 : i32, i32
  }
  func.func @transform_12(%arg0: i32, %arg1: i32) -> (i32, i32, i32) {
    %c0_i32 = arith.constant 0 : i32
    %c0_i32_0 = arith.constant 0 : i32
    return %arg0, %arg1, %c0_i32 : i32, i32, i32
  }
}

</mosaic_0001>

<llo_original>
// kernel: tpu_custom_call.1
$region0: #{tpu_custom_call.1}
  #allocation0 [shape = 'u32[]', space=smem, size = 0x4, offset = 0x4, fixed_abs, tag = 'smem constant byte address 0x4 - core index']
  #allocation1 [shape = 'u32[144,128]{1,0:T(1,128)}', space=vmem, size = 0x12000, scoped, tag = 'internal scratch']
  #allocation2 [shape = 'bf16[64,16]{1,0:T(8,128)(2,1)}', space=vmem, size = 0x4000, scoped, tag = 'scratch operand']
  #allocation3 [shape = 'bf16[16,64]{1,0:T(8,128)(2,1)}', space=vmem, size = 0x1000, scoped, tag = 'scratch operand']
  #allocation4 [shape = 'bf16[16,64]{1,0:T(8,128)(2,1)}', space=vmem, size = 0x1000, scoped, tag = 'scratch operand']
  #allocation5 [shape = 'bf16[4,16,16]{2,1,0:T(8,128)(2,1)}', space=vmem, size = 0x4000, scoped, tag = 'scratch operand']
  #allocation6 [shape = 'bf16[16,64]{1,0:T(8,128)(2,1)}', space=vmem, size = 0x1000, scoped, tag = 'scratch operand']
  %s0 = inlined_call_operand.vmem [shape: bf16[2,16,32], index: 0, kind: input, shape index: {}]
  %s1 = inlined_call_operand.vmem [shape: bf16[2,32,16], index: 1, kind: input, shape index: {}]
  %s2 = inlined_call_operand.vmem [shape: bf16[32,64], index: 2, kind: input, shape index: {}]
  %s3 = inlined_call_operand.vmem [shape: bf16[64,32], index: 3, kind: input, shape index: {}]
  %s4 = inlined_call_operand.vmem [shape: bf16[32,64], index: 4, kind: input, shape index: {}]
  %s5 = inlined_call_operand.vmem [shape: f32[4,4], index: 5, kind: input, shape index: {}]
  %s6 = inlined_call_operand.vmem [shape: f32[4], index: 6, kind: input, shape index: {}]
  %s7 = inlined_call_operand.vmem [shape: f32[4,4], index: 7, kind: input, shape index: {}]
  %s8 = inlined_call_operand.vmem [shape: f32[4], index: 8, kind: input, shape index: {}]
  %s9 = inlined_call_operand.vmem [shape: f32[4], index: 9, kind: input, shape index: {}]
  %s10 = inlined_call_operand.vmem [shape: bf16[64,32], index: 10, kind: input, shape index: {}]
  %s11 = inlined_call_operand.vmem [shape: f32[1,32], index: 11, kind: input, shape index: {}]
  %s12 = inlined_call_operand.hbm [shape: f32[2,16,32], index: 12, kind: output, shape index: {}]
  %s13 = sld [smem:[#allocation0]]
  $region105: #{tpu_custom_call.1} parent=0
    _
  %s15 = ssub.s32 1, %s13
  %s16 = scalar_select 0, %s15, %s13
  $region1: #{tpu_custom_call.1} parent=0
    #allocation7 [shape = 'u8[2048]{0}', space=smem, size = 0x800, scoped, tag = 'input window, operand 5, single buffered']
    #allocation8 [shape = 's32[2]{0}', space=sflag, size = 0x8, scoped, tag = 'scoped memory for tpu_custom_call.1']
    #allocation9 [shape = 's32[2]{0}', space=sflag, size = 0x8, scoped, tag = 'scoped memory for tpu_custom_call.1']
    #allocation10 [shape = 'u8[512]{0}', space=smem, size = 0x200, scoped, tag = 'input window, operand 6, single buffered']
    #allocation11 [shape = 's32[1]{0}', space=sflag, size = 0x4, scoped, tag = 'scoped memory for tpu_custom_call.1']
    #allocation12 [shape = 'u8[2048]{0}', space=smem, size = 0x800, scoped, tag = 'input window, operand 7, single buffered']
    #allocation13 [shape = 'u8[512]{0}', space=smem, size = 0x200, scoped, tag = 'input window, operand 8, single buffered']
    #allocation14 [shape = 's32[1]{0}', space=sflag, size = 0x4, scoped, tag = 'scoped memory for tpu_custom_call.1']
    #allocation15 [shape = 'u8[512]{0}', space=smem, size = 0x200, scoped, tag = 'input window, operand 9, single buffered']
    #allocation16 [shape = 'u8[16384]{0}', space=vmem, size = 0x4000, scoped, tag = 'output window, operand 0']
    %17 = vsyncpa [#allocation9], 0
    %18 = vsyncpa [#allocation11], 0
    %19 = vsyncpa [#allocation14], 0
    %20 = vsyncpa [#allocation8], 0
    %s21 = scalar_lea.sflag [#allocation8], 1
    %22 = vsyncpa %s21, 0
    loop: start=0, step=1, limit=4
    $region2: #{tpu_custom_call.1} parent=1 // loop_pre_header
      _
    $region3: #{tpu_custom_call.1} parent=1 // loop_header
      %s24 = sphi 0, %s28
      %p25 = scmp.ge.s32.totalorder %s24, 4
      %s31 = sphi 0, %s43
      %s32 = sphi 0, %s39
      %s33 = sphi 0, %s31
      %s34 = sphi 0, %s32
      %s35 = sphi 0, %s33
      %s36 = sphi 0, %s34
      %s46 = sphi 0, %s48
      %s49 = sphi 0, %s46
      %s50 = sphi 0, %s49
      %s66 = sphi 0, %s50
      %s72 = sphi 0, %s74
      %s75 = sphi 0, %s72
      %s76 = sphi 0, %s75
      %s92 = sphi 0, %s76
      %s96 = sphi 0, %s96
      %s98 = sphi 0, %s96
      %s99 = sphi 0, %s98
      %s113 = sphi 0, %s99
      %s117 = sphi 0, %s117
      %s119 = sphi 0, %s117
      %s120 = sphi 0, %s119
      %s134 = sphi 0, %s120
      %s138 = sphi 0, %s138
      %s140 = sphi 0, %s138
      %s141 = sphi 0, %s140
      %s155 = sphi 0, %s141
      %s159 = sphi 0, %s159
      %s161 = sphi 0, %s159
      %s162 = sphi 0, %s161
      %s176 = sphi 0, %s162
      %s180 = sphi 0, %s180
      %s182 = sphi 0, %s180
      %s183 = sphi 0, %s182
      %s197 = sphi 0, %s183
      %s201 = sphi 0, %s201
      %s203 = sphi 0, %s201
      %s204 = sphi 0, %s203
      %s218 = sphi 0, %s204
      %s222 = sphi 0, %s222
      %s224 = sphi 0, %s222
      %s225 = sphi 0, %s224
      %s239 = sphi 0, %s225
      %s243 = sphi 0, %s243
      %s245 = sphi 0, %s243
      %s246 = sphi 0, %s245
      %s260 = sphi 0, %s246
      %s264 = sphi 0, %s264
      %s266 = sphi 0, %s264
      %s267 = sphi 0, %s266
      %s281 = sphi 0, %s267
      %s285 = sphi 0, %s285
      %s287 = sphi 0, %s285
      %s288 = sphi 0, %s287
      %s302 = sphi 0, %s288
      %s310 = sphi 0, %s312
      %s313 = sphi 0, %s310
      %s314 = sphi 0, %s313
      %s330 = sphi 0, %s314
    $region4: #{tpu_custom_call.1} parent=1 // loop_header_branch
      %27 = sbr.rel (%p25) target = $region8
    $region5: #{tpu_custom_call.1} parent=1 // loop_body
      %s29 = ssub.s32 %s24, 1
      %s30 = ssub.s32 %s24, 2
      %s37 = sadd.s32 1, %s32
      %p38 = scmp.ge.s32.totalorder %s37, 1
      %s39 = scalar_select %p38, 0, %s37
      %s40 = sadd.s32 1, %s31
      %s41 = scalar_select %p38, %s40, %s31
      %p42 = scmp.ge.s32.totalorder %s41, 2
      %s43 = scalar_select %p42, 0, %s41
      %s44 = ssub.s32 %s31, %s43
      %p45 = scmp.eq.s32.totalorder %s44, 0
      %s47 = sadd.s32 %s46, 1
      %s48 = scalar_select %p45, %s46, %s47
      %p51 = pneg %p45
      %p52 = scmp.eq.s32.totalorder %s24, 1
      %p53 = por %p51, %p52
      %p54 = scmp.ne.s32.totalorder %s46, %s49
      %p55 = scmp.eq.s32.totalorder %s24, 0
      %p56 = por %p54, %p55
      %p57 = scmp.ne.s32.totalorder %s46, %s49
      %p58 = scmp.eq.s32.totalorder %s29, 1
      %p59 = por %p57, %p58
      %p60 = scmp.ne.s32.totalorder %s49, %s50
      %p61 = scmp.eq.s32.totalorder %s29, 0
      %p62 = por %p60, %p61
      %p63 = scmp.ne.s32.totalorder %s49, %s50
      %p64 = scmp.eq.s32.totalorder %s30, 1
      %p65 = por %p63, %p64
      %p67 = scmp.ne.s32.totalorder %s50, %s66
      %p68 = scmp.eq.s32.totalorder %s30, 0
      %p69 = por %p67, %p68
      %s70 = ssub.s32 %s31, %s43
      %p71 = scmp.eq.s32.totalorder %s70, 0
      %s73 = sadd.s32 %s72, 1
      %s74 = scalar_select %p71, %s72, %s73
      %p77 = pneg %p71
      %p78 = scmp.eq.s32.totalorder %s24, 1
      %p79 = por %p77, %p78
      %p80 = scmp.ne.s32.totalorder %s72, %s75
      %p81 = scmp.eq.s32.totalorder %s24, 0
      %p82 = por %p80, %p81
      %p83 = scmp.ne.s32.totalorder %s72, %s75
      %p84 = scmp.eq.s32.totalorder %s29, 1
      %p85 = por %p83, %p84
      %p86 = scmp.ne.s32.totalorder %s75, %s76
      %p87 = scmp.eq.s32.totalorder %s29, 0
      %p88 = por %p86, %p87
      %p89 = scmp.ne.s32.totalorder %s75, %s76
      %p90 = scmp.eq.s32.totalorder %s30, 1
      %p91 = por %p89, %p90
      %p93 = scmp.ne.s32.totalorder %s76, %s92
      %p94 = scmp.eq.s32.totalorder %s30, 0
      %p95 = por %p93, %p94
      %s97 = sadd.s32 %s96, 1
      %p100 = scmp.eq.s32.totalorder %s24, 1
      %p101 = scmp.ne.s32.totalorder %s96, %s98
      %p102 = scmp.eq.s32.totalorder %s24, 0
      %p103 = por %p101, %p102
      %p104 = scmp.ne.s32.totalorder %s96, %s98
      %p105 = scmp.eq.s32.totalorder %s29, 1
      %p106 = por %p104, %p105
      %p107 = scmp.ne.s32.totalorder %s98, %s99
      %p108 = scmp.eq.s32.totalorder %s29, 0
      %p109 = por %p107, %p108
      %p110 = scmp.ne.s32.totalorder %s98, %s99
      %p111 = scmp.eq.s32.totalorder %s30, 1
      %p112 = por %p110, %p111
      %p114 = scmp.ne.s32.totalorder %s99, %s113
      %p115 = scmp.eq.s32.totalorder %s30, 0
      %p116 = por %p114, %p115
      %s118 = sadd.s32 %s117, 1
      %p121 = scmp.eq.s32.totalorder %s24, 1
      %p122 = scmp.ne.s32.totalorder %s117, %s119
      %p123 = scmp.eq.s32.totalorder %s24, 0
      %p124 = por %p122, %p123
      %p125 = scmp.ne.s32.totalorder %s117, %s119
      %p126 = scmp.eq.s32.totalorder %s29, 1
      %p127 = por %p125, %p126
      %p128 = scmp.ne.s32.totalorder %s119, %s120
      %p129 = scmp.eq.s32.totalorder %s29, 0
      %p130 = por %p128, %p129
      %p131 = scmp.ne.s32.totalorder %s119, %s120
      %p132 = scmp.eq.s32.totalorder %s30, 1
      %p133 = por %p131, %p132
      %p135 = scmp.ne.s32.totalorder %s120, %s134
      %p136 = scmp.eq.s32.totalorder %s30, 0
      %p137 = por %p135, %p136
      %s139 = sadd.s32 %s138, 1
      %p142 = scmp.eq.s32.totalorder %s24, 1
      %p143 = scmp.ne.s32.totalorder %s138, %s140
      %p144 = scmp.eq.s32.totalorder %s24, 0
      %p145 = por %p143, %p144
      %p146 = scmp.ne.s32.totalorder %s138, %s140
      %p147 = scmp.eq.s32.totalorder %s29, 1
      %p148 = por %p146, %p147
      %p149 = scmp.ne.s32.totalorder %s140, %s141
      %p150 = scmp.eq.s32.totalorder %s29, 0
      %p151 = por %p149, %p150
      %p152 = scmp.ne.s32.totalorder %s140, %s141
      %p153 = scmp.eq.s32.totalorder %s30, 1
      %p154 = por %p152, %p153
      %p156 = scmp.ne.s32.totalorder %s141, %s155
      %p157 = scmp.eq.s32.totalorder %s30, 0
      %p158 = por %p156, %p157
      %s160 = sadd.s32 %s159, 1
      %p163 = scmp.eq.s32.totalorder %s24, 1
      %p164 = scmp.ne.s32.totalorder %s159, %s161
      %p165 = scmp.eq.s32.totalorder %s24, 0
      %p166 = por %p164, %p165
      %p167 = scmp.ne.s32.totalorder %s159, %s161
      %p168 = scmp.eq.s32.totalorder %s29, 1
      %p169 = por %p167, %p168
      %p170 = scmp.ne.s32.totalorder %s161, %s162
      %p171 = scmp.eq.s32.totalorder %s29, 0
      %p172 = por %p170, %p171
      %p173 = scmp.ne.s32.totalorder %s161, %s162
      %p174 = scmp.eq.s32.totalorder %s30, 1
      %p175 = por %p173, %p174
      %p177 = scmp.ne.s32.totalorder %s162, %s176
      %p178 = scmp.eq.s32.totalorder %s30, 0
      %p179 = por %p177, %p178
      %s181 = sadd.s32 %s180, 1
      %p184 = scmp.eq.s32.totalorder %s24, 1
      %p185 = scmp.ne.s32.totalorder %s180, %s182
      %p186 = scmp.eq.s32.totalorder %s24, 0
      %p187 = por %p185, %p186
      %p188 = scmp.ne.s32.totalorder %s180, %s182
      %p189 = scmp.eq.s32.totalorder %s29, 1
      %p190 = por %p188, %p189
      %p191 = scmp.ne.s32.totalorder %s182, %s183
      %p192 = scmp.eq.s32.totalorder %s29, 0
      %p193 = por %p191, %p192
      %p194 = scmp.ne.s32.totalorder %s182, %s183
      %p195 = scmp.eq.s32.totalorder %s30, 1
      %p196 = por %p194, %p195
      %p198 = scmp.ne.s32.totalorder %s183, %s197
      %p199 = scmp.eq.s32.totalorder %s30, 0
      %p200 = por %p198, %p199
      %s202 = sadd.s32 %s201, 1
      %p205 = scmp.eq.s32.totalorder %s24, 1
      %p206 = scmp.ne.s32.totalorder %s201, %s203
      %p207 = scmp.eq.s32.totalorder %s24, 0
      %p208 = por %p206, %p207
      %p209 = scmp.ne.s32.totalorder %s201, %s203
      %p210 = scmp.eq.s32.totalorder %s29, 1
      %p211 = por %p209, %p210
      %p212 = scmp.ne.s32.totalorder %s203, %s204
      %p213 = scmp.eq.s32.totalorder %s29, 0
      %p214 = por %p212, %p213
      %p215 = scmp.ne.s32.totalorder %s203, %s204
      %p216 = scmp.eq.s32.totalorder %s30, 1
      %p217 = por %p215, %p216
      %p219 = scmp.ne.s32.totalorder %s204, %s218
      %p220 = scmp.eq.s32.totalorder %s30, 0
      %p221 = por %p219, %p220
      %s223 = sadd.s32 %s222, 1
      %p226 = scmp.eq.s32.totalorder %s24, 1
      %p227 = scmp.ne.s32.totalorder %s222, %s224
      %p228 = scmp.eq.s32.totalorder %s24, 0
      %p229 = por %p227, %p228
      %p230 = scmp.ne.s32.totalorder %s222, %s224
      %p231 = scmp.eq.s32.totalorder %s29, 1
      %p232 = por %p230, %p231
      %p233 = scmp.ne.s32.totalorder %s224, %s225
      %p234 = scmp.eq.s32.totalorder %s29, 0
      %p235 = por %p233, %p234
      %p236 = scmp.ne.s32.totalorder %s224, %s225
      %p237 = scmp.eq.s32.totalorder %s30, 1
      %p238 = por %p236, %p237
      %p240 = scmp.ne.s32.totalorder %s225, %s239
      %p241 = scmp.eq.s32.totalorder %s30, 0
      %p242 = por %p240, %p241
      %s244 = sadd.s32 %s243, 1
      %p247 = scmp.eq.s32.totalorder %s24, 1
      %p248 = scmp.ne.s32.totalorder %s243, %s245
      %p249 = scmp.eq.s32.totalorder %s24, 0
      %p250 = por %p248, %p249
      %p251 = scmp.ne.s32.totalorder %s243, %s245
      %p252 = scmp.eq.s32.totalorder %s29, 1
      %p253 = por %p251, %p252
      %p254 = scmp.ne.s32.totalorder %s245, %s246
      %p255 = scmp.eq.s32.totalorder %s29, 0
      %p256 = por %p254, %p255
      %p257 = scmp.ne.s32.totalorder %s245, %s246
      %p258 = scmp.eq.s32.totalorder %s30, 1
      %p259 = por %p257, %p258
      %p261 = scmp.ne.s32.totalorder %s246, %s260
      %p262 = scmp.eq.s32.totalorder %s30, 0
      %p263 = por %p261, %p262
      %s265 = sadd.s32 %s264, 1
      %p268 = scmp.eq.s32.totalorder %s24, 1
      %p269 = scmp.ne.s32.totalorder %s264, %s266
      %p270 = scmp.eq.s32.totalorder %s24, 0
      %p271 = por %p269, %p270
      %p272 = scmp.ne.s32.totalorder %s264, %s266
      %p273 = scmp.eq.s32.totalorder %s29, 1
      %p274 = por %p272, %p273
      %p275 = scmp.ne.s32.totalorder %s266, %s267
      %p276 = scmp.eq.s32.totalorder %s29, 0
      %p277 = por %p275, %p276
      %p278 = scmp.ne.s32.totalorder %s266, %s267
      %p279 = scmp.eq.s32.totalorder %s30, 1
      %p280 = por %p278, %p279
      %p282 = scmp.ne.s32.totalorder %s267, %s281
      %p283 = scmp.eq.s32.totalorder %s30, 0
      %p284 = por %p282, %p283
      %s286 = sadd.s32 %s285, 1
      %p289 = scmp.eq.s32.totalorder %s24, 1
      %p290 = scmp.ne.s32.totalorder %s285, %s287
      %p291 = scmp.eq.s32.totalorder %s24, 0
      %p292 = por %p290, %p291
      %p293 = scmp.ne.s32.totalorder %s285, %s287
      %p294 = scmp.eq.s32.totalorder %s29, 1
      %p295 = por %p293, %p294
      %p296 = scmp.ne.s32.totalorder %s287, %s288
      %p297 = scmp.eq.s32.totalorder %s29, 0
      %p298 = por %p296, %p297
      %p299 = scmp.ne.s32.totalorder %s287, %s288
      %p300 = scmp.eq.s32.totalorder %s30, 1
      %p301 = por %p299, %p300
      %p303 = scmp.ne.s32.totalorder %s288, %s302
      %p304 = scmp.eq.s32.totalorder %s30, 0
      %p305 = por %p303, %p304
      %s306 = ssub.s32 %s31, %s43
      %s307 = ssub.s32 %s32, %s39
      %s308 = sor.u32 %s306, %s307
      %p309 = scmp.eq.s32.totalorder %s308, 0
      %s311 = sadd.s32 %s310, 1
      %s312 = scalar_select %p309, %s310, %s311
      %p315 = pneg %p309
      %p316 = scmp.eq.s32.totalorder %s24, 1
      %p317 = por %p315, %p316
      %p318 = scmp.ne.s32.totalorder %s310, %s313
      %p319 = scmp.eq.s32.totalorder %s24, 0
      %p320 = por %p318, %p319
      %p321 = scmp.ne.s32.totalorder %s310, %s313
      %p322 = scmp.eq.s32.totalorder %s29, 1
      %p323 = por %p321, %p322
      %p324 = scmp.ne.s32.totalorder %s313, %s314
      %p325 = scmp.eq.s32.totalorder %s29, 0
      %p326 = por %p324, %p325
      %p327 = scmp.ne.s32.totalorder %s313, %s314
      %p328 = scmp.eq.s32.totalorder %s30, 1
      %p329 = por %p327, %p328
      %p331 = scmp.ne.s32.totalorder %s314, %s330
      %p332 = scmp.eq.s32.totalorder %s30, 0
      %p333 = por %p331, %p332
      %p334 = scmp.le.s32.totalorder 1, %s24
      %p335 = scmp.lt.s32.totalorder %s24, 3
      %p336 = pnand %p334, %p335
      %p337 = pneg %p336
      // Predicated region
      $region9: #{tpu_custom_call.1} parent=5 // pred_check
        _
      $region10: #{tpu_custom_call.1} parent=5 // pred_check_branch
        %339 = sbr.rel (%p336) target = $region12
      $region11: #{tpu_custom_call.1} parent=5 // pred_region
        %s340 = ssub.s32 %s24, 1
        // Predicated region
        $region13: #{tpu_custom_call.1} parent=11 // pred_check
          %p341 = pneg %p109
        $region14: #{tpu_custom_call.1} parent=11 // pred_check_branch
          %343 = sbr.rel (%p341) target = $region16
        $region15: #{tpu_custom_call.1} parent=11 // pred_region
          _
        $region16: #{tpu_custom_call.1} parent=11 // pred_fallthru
          _
        // Predicated region
        $region17: #{tpu_custom_call.1} parent=11 // pred_check
          %p344 = pneg %p130
        $region18: #{tpu_custom_call.1} parent=11 // pred_check_branch
          %346 = sbr.rel (%p344) target = $region20
        $region19: #{tpu_custom_call.1} parent=11 // pred_region
          _
        $region20: #{tpu_custom_call.1} parent=11 // pred_fallthru
          _
        // Predicated region
        $region21: #{tpu_custom_call.1} parent=11 // pred_check
          %p347 = pneg %p151
        $region22: #{tpu_custom_call.1} parent=11 // pred_check_branch
          %349 = sbr.rel (%p347) target = $region24
        $region23: #{tpu_custom_call.1} parent=11 // pred_region
          _
        $region24: #{tpu_custom_call.1} parent=11 // pred_fallthru
          _
        // Predicated region
        $region25: #{tpu_custom_call.1} parent=11 // pred_check
          %p350 = pneg %p172
        $region26: #{tpu_custom_call.1} parent=11 // pred_check_branch
          %352 = sbr.rel (%p350) target = $region28
        $region27: #{tpu_custom_call.1} parent=11 // pred_region
          %s354 = ssub.s32 64, 64
          %355 = vsyncadd [#allocation9], %s354
          %s357 = sshll.u32 %s5, 4
          %s358 = int_to_ptr.vmem [resolvable:$true] %s357
          %360 = dma.vmem_to_smem %s358, 64, [#allocation7], [#allocation9]
        $region28: #{tpu_custom_call.1} parent=11 // pred_fallthru
          _
        // Predicated region
        $region29: #{tpu_custom_call.1} parent=11 // pred_check
          %p361 = pneg %p193
        $region30: #{tpu_custom_call.1} parent=11 // pred_check_branch
          %363 = sbr.rel (%p361) target = $region32
        $region31: #{tpu_custom_call.1} parent=11 // pred_region
          %s365 = ssub.s32 16, 16
          %366 = vsyncadd [#allocation11], %s365
          %s368 = sshll.u32 %s6, 4
          %s369 = int_to_ptr.vmem [resolvable:$true] %s368
          %371 = dma.vmem_to_smem %s369, 16, [#allocation10], [#allocation11]
        $region32: #{tpu_custom_call.1} parent=11 // pred_fallthru
          _
        // Predicated region
        $region33: #{tpu_custom_call.1} parent=11 // pred_check
          %p372 = pneg %p214
        $region34: #{tpu_custom_call.1} parent=11 // pred_check_branch
          %374 = sbr.rel (%p372) target = $region36
        $region35: #{tpu_custom_call.1} parent=11 // pred_region
          %s376 = ssub.s32 64, 64
          %377 = vsyncadd [#allocation11], %s376
          %s379 = sshll.u32 %s7, 4
          %s380 = int_to_ptr.vmem [resolvable:$true] %s379
          %382 = dma.vmem_to_smem %s380, 64, [#allocation12], [#allocation11]
        $region36: #{tpu_custom_call.1} parent=11 // pred_fallthru
          _
        // Predicated region
        $region37: #{tpu_custom_call.1} parent=11 // pred_check
          %p383 = pneg %p235
        $region38: #{tpu_custom_call.1} parent=11 // pred_check_branch
          %385 = sbr.rel (%p383) target = $region40
        $region39: #{tpu_custom_call.1} parent=11 // pred_region
          %s387 = ssub.s32 16, 16
          %388 = vsyncadd [#allocation14], %s387
          %s390 = sshll.u32 %s8, 4
          %s391 = int_to_ptr.vmem [resolvable:$true] %s390
          %393 = dma.vmem_to_smem %s391, 16, [#allocation13], [#allocation14]
        $region40: #{tpu_custom_call.1} parent=11 // pred_fallthru
          _
        // Predicated region
        $region41: #{tpu_custom_call.1} parent=11 // pred_check
          %p394 = pneg %p256
        $region42: #{tpu_custom_call.1} parent=11 // pred_check_branch
          %396 = sbr.rel (%p394) target = $region44
        $region43: #{tpu_custom_call.1} parent=11 // pred_region
          %s398 = ssub.s32 16, 16
          %399 = vsyncadd [#allocation14], %s398
          %s401 = sshll.u32 %s9, 4
          %s402 = int_to_ptr.vmem [resolvable:$true] %s401
          %404 = dma.vmem_to_smem %s402, 16, [#allocation15], [#allocation14]
        $region44: #{tpu_custom_call.1} parent=11 // pred_fallthru
          _
        // Predicated region
        $region45: #{tpu_custom_call.1} parent=11 // pred_check
          %p405 = pneg %p277
        $region46: #{tpu_custom_call.1} parent=11 // pred_check_branch
          %407 = sbr.rel (%p405) target = $region48
        $region47: #{tpu_custom_call.1} parent=11 // pred_region
          _
        $region48: #{tpu_custom_call.1} parent=11 // pred_fallthru
          _
        // Predicated region
        $region49: #{tpu_custom_call.1} parent=11 // pred_check
          %p408 = pneg %p298
        $region50: #{tpu_custom_call.1} parent=11 // pred_check_branch
          %410 = sbr.rel (%p408) target = $region52
        $region51: #{tpu_custom_call.1} parent=11 // pred_region
          _
        $region52: #{tpu_custom_call.1} parent=11 // pred_fallthru
          _
      $region12: #{tpu_custom_call.1} parent=5 // pred_fallthru
        _
      %p411 = scmp.lt.s32.totalorder %s24, 2
      // Predicated region
      $region53: #{tpu_custom_call.1} parent=5 // pred_check
        %p412 = pneg %p411
      $region54: #{tpu_custom_call.1} parent=5 // pred_check_branch
        %414 = sbr.rel (%p412) target = $region56
      $region55: #{tpu_custom_call.1} parent=5 // pred_region
        // Predicated region
        $region57: #{tpu_custom_call.1} parent=55 // pred_check
          %p415 = pneg %p56
        $region58: #{tpu_custom_call.1} parent=55 // pred_check_branch
          %417 = sbr.rel (%p415) target = $region60
        $region59: #{tpu_custom_call.1} parent=55 // pred_region
          %p418 = scmp.lt.s32.totalorder %s31, 1
          %s419 = scalar_select %p418, %s31, 1
          %s420 = smul.addr %s419, 2
          %s421 = smul.addr %s420, 4
          %s422 = scalar_lea.vmem %s0, %s421
        $region60: #{tpu_custom_call.1} parent=55 // pred_fallthru
          _
        // Predicated region
        $region61: #{tpu_custom_call.1} parent=55 // pred_check
          %p423 = pneg %p82
        $region62: #{tpu_custom_call.1} parent=55 // pred_check_branch
          %425 = sbr.rel (%p423) target = $region64
        $region63: #{tpu_custom_call.1} parent=55 // pred_region
          %p426 = scmp.lt.s32.totalorder %s31, 1
          %s427 = scalar_select %p426, %s31, 1
          %s428 = smul.addr %s427, 4
          %s429 = smul.addr %s428, 4
          %s430 = scalar_lea.vmem %s1, %s429
        $region64: #{tpu_custom_call.1} parent=55 // pred_fallthru
          _
      $region56: #{tpu_custom_call.1} parent=5 // pred_fallthru
        _
      %p431 = scmp.le.s32.totalorder 1, %s24
      %p432 = scmp.lt.s32.totalorder %s24, 3
      %p433 = pnand %p431, %p432
      %p434 = pneg %p433
      // Predicated region
      $region65: #{tpu_custom_call.1} parent=5 // pred_check
        _
      $region66: #{tpu_custom_call.1} parent=5 // pred_check_branch
        %436 = sbr.rel (%p433) target = $region68
      $region67: #{tpu_custom_call.1} parent=5 // pred_region
        %s437 = ssub.s32 %s24, 1
        // Predicated region
        $region69: #{tpu_custom_call.1} parent=67 // pred_check
          %p438 = pneg %p172
        $region70: #{tpu_custom_call.1} parent=67 // pred_check_branch
          %440 = sbr.rel (%p438) target = $region72
        $region71: #{tpu_custom_call.1} parent=67 // pred_region
          %441 = dma.done [#allocation9], 64
        $region72: #{tpu_custom_call.1} parent=67 // pred_fallthru
          _
        // Predicated region
        $region73: #{tpu_custom_call.1} parent=67 // pred_check
          %p442 = pneg %p193
        $region74: #{tpu_custom_call.1} parent=67 // pred_check_branch
          %444 = sbr.rel (%p442) target = $region76
        $region75: #{tpu_custom_call.1} parent=67 // pred_region
          %445 = dma.done [#allocation11], 16
        $region76: #{tpu_custom_call.1} parent=67 // pred_fallthru
          _
        // Predicated region
        $region77: #{tpu_custom_call.1} parent=67 // pred_check
          %p446 = pneg %p214
        $region78: #{tpu_custom_call.1} parent=67 // pred_check_branch
          %448 = sbr.rel (%p446) target = $region80
        $region79: #{tpu_custom_call.1} parent=67 // pred_region
          %449 = dma.done [#allocation11], 64
        $region80: #{tpu_custom_call.1} parent=67 // pred_fallthru
          _
        // Predicated region
        $region81: #{tpu_custom_call.1} parent=67 // pred_check
          %p450 = pneg %p235
        $region82: #{tpu_custom_call.1} parent=67 // pred_check_branch
          %452 = sbr.rel (%p450) target = $region84
        $region83: #{tpu_custom_call.1} parent=67 // pred_region
          %453 = dma.done [#allocation14], 16
        $region84: #{tpu_custom_call.1} parent=67 // pred_fallthru
          _
        // Predicated region
        $region85: #{tpu_custom_call.1} parent=67 // pred_check
          %p454 = pneg %p256
        $region86: #{tpu_custom_call.1} parent=67 // pred_check_branch
          %456 = sbr.rel (%p454) target = $region88
        $region87: #{tpu_custom_call.1} parent=67 // pred_region
          %457 = dma.done [#allocation14], 16
        $region88: #{tpu_custom_call.1} parent=67 // pred_fallthru
          _
        %458 = sfence
        %p459 = scmp.lt.s32.totalorder %s33, 1
        %s460 = scalar_select %p459, %s33, 1
        %s461 = smul.addr %s460, 2
        %s462 = smul.addr %s461, 4
        %s463 = scalar_lea.vmem %s0, %s462
        %p464 = pneg %p62
        %p465 = pneg %p59
        %p466 = scmp.lt.s32.totalorder %s33, 1
        %s467 = scalar_select %p466, %s33, 1
        %s468 = smul.addr %s467, 4
        %s469 = smul.addr %s468, 4
        %s470 = scalar_lea.vmem %s1, %s469
        %p471 = pneg %p88
        %p472 = pneg %p85
        %p473 = pneg %p109
        %p474 = pneg %p106
        %p475 = pneg %p130
        %p476 = pneg %p127
        %p477 = pneg %p151
        %p478 = pneg %p148
        %p479 = pneg %p172
        %p480 = pneg %p169
        %p481 = pneg %p193
        %p482 = pneg %p190
        %p483 = pneg %p214
        %p484 = pneg %p211
        %p485 = pneg %p235
        %p486 = pneg %p232
        %p487 = pneg %p256
        %p488 = pneg %p253
        %p489 = pneg %p277
        %p490 = pneg %p274
        %p491 = pneg %p298
        %p492 = pneg %p295
        %p493 = pneg %p326
        %p494 = pneg %p323
        %s495 = sand.u32 %s313, 1
        %s496 = scalar_lea.sflag [#allocation8], %s495
        %s497 = sand.u32 %s313, 1
        %s498 = smul.addr %s497, 16
        %s499 = scalar_lea.vmem [#allocation16], %s498
        %p500 = scmp.lt.s32.totalorder %s33, 1
        %s501 = scalar_select %p500, %s33, 1
        %s502 = smul.addr %s501, 2
        %s503 = smul.addr %s502, 4
        %s504 = scalar_lea.vmem %s0, %s503
        %p505 = scmp.lt.s32.totalorder %s33, 1
        %s506 = scalar_select %p505, %s33, 1
        %s507 = smul.addr %s506, 4
        %s508 = smul.addr %s507, 4
        %s509 = scalar_lea.vmem %s1, %s508
        %s510 = smul.u32 2, %s34
        %p512 = scmp.eq.s32.totalorder %s34, 0
        // Predicated region
        $region89: #{tpu_custom_call.1} parent=67 // pred_check
          %p513 = pneg %p512
        $region90: #{tpu_custom_call.1} parent=67 // pred_check_branch
          %515 = sbr.rel (%p513) target = $region92
        $region91: #{tpu_custom_call.1} parent=67 // pred_region
          %v516 = vld [vmem:[%s3] sm:$0xf]
          %v517 = vld [vmem:[%s3 + $0x4] sm:$0xf]
          %v518 = vld [vmem:[%s3 + $0x8] sm:$0xf]
          %v519 = vld [vmem:[%s3 + $0xc] sm:$0xf]
          %v520 = vld [vmem:[%s3 + $0x10] sm:$0xf]
          %v521 = vld [vmem:[%s3 + $0x14] sm:$0xf]
          %v522 = vld [vmem:[%s3 + $0x18] sm:$0xf]
          %v523 = vld [vmem:[%s3 + $0x1c] sm:$0xf]
          %v524 = vld [vmem:[%s509] sm:$0xf]
          %v525 = vld [vmem:[%s509 + $0x4] sm:$0xf]
          %v526 = vld [vmem:[%s509 + $0x8] sm:$0xf]
          %v527 = vld [vmem:[%s509 + $0xc] sm:$0xf]
          %v536 = vunpack.c.l.b16 %v516
          %v537 = vunpack.c.l.b16 %v517
          %v538 = vunpack.c.l.b16 %v518
          %v539 = vunpack.c.l.b16 %v519
          %v540 = vunpack.c.l.b16 %v520
          %v541 = vunpack.c.l.b16 %v521
          %v542 = vunpack.c.l.b16 %v522
          %v543 = vunpack.c.l.b16 %v523
          %v544 = vpack.c.b16 %v537, %v536
          %v545 = vpack.c.b16 %v539, %v538
          %v546 = vpack.c.b16 %v541, %v540
          %v547 = vpack.c.b16 %v543, %v542
          %v552 = vunpack.c.l.b16 %v524
          %v553 = vunpack.c.l.b16 %v525
          %v554 = vunpack.c.l.b16 %v526
          %v555 = vunpack.c.l.b16 %v527
          %v556 = vpack.c.b16 %v553, %v552
          %v557 = vpack.c.b16 %v555, %v554
          %vm560 = vcmask 261120
          %v562 = vsel %vm560, %v544, 0
          %v565 = vsel %vm560, %v545, 0
          %v568 = vsel %vm560, %v546, 0
          %v571 = vsel %vm560, %v547, 0
          %573 = vmatprep.subr.bf16.mxu0 0
          %574 = vmatpush1.bf16.msra.mxu0 0
          %575 = vmatprep.subr.bf16.mxu0 0
          %576 = vmatpush1.bf16.msra.mxu0 0
          %577 = vmatprep.subr.bf16.mxu0 0
          %578 = vmatpush1.bf16.msra.mxu0 0
          %579 = vmatprep.subr.bf16.mxu0 0
          %580 = vmatpush1.bf16.msra.mxu0 0
          %581 = vmatprep.subr.bf16.mxu0 0
          %582 = vmatpush1.bf16.msra.mxu0 0
          %583 = vmatprep.subr.bf16.mxu0 0
          %584 = vmatpush1.bf16.msra.mxu0 0
          %585 = vmatprep.subr.bf16.mxu0 0
          %586 = vmatpush1.bf16.msra.mxu0 %v557
          %587 = vmatprep.subr.bf16.mxu0 0
          %588 = vmatpush1.bf16.msra.mxu0 %v556
          %589 = vmatprep.subr.bf16.mxu0 0
          %590 = vmatpush2.bf16.msra.mxu0 0
          %591 = vmatprep.subr.bf16.mxu0 0
          %592 = vmatpush2.bf16.msra.mxu0 0
          %593 = vmatprep.subr.bf16.mxu0 0
          %594 = vmatpush2.bf16.msra.mxu0 0
          %595 = vmatprep.subr.bf16.mxu0 0
          %596 = vmatpush2.bf16.msra.mxu0 0
          %597 = vmatprep.subr.bf16.mxu0 0
          %598 = vmatpush2.bf16.msra.mxu0 0
          %599 = vmatprep.subr.bf16.mxu0 0
          %600 = vmatpush2.bf16.msra.mxu0 0
          %601 = vmatprep.subr.bf16.mxu0 0
          %602 = vmatpush2.bf16.msra.mxu0 0
          %603 = vmatprep.subr.bf16.mxu0 0
          %604 = vmatpush2.bf16.msra.mxu0 0
          %605 = vmatprep.mubr.bf16.mxu0 0
          %606 = vmatmul.mubr.bf16.gmra.mxu0 %v562
          %v607 = vpop.f32.mrf.mxu0
          %v608 = vadd.f32 0.0, %v607
          %v609 = vpop.f32.mrf.mxu0
          %v610 = vpop.f32.mrf.mxu0
          %v611 = vadd.f32 0.0, %v610
          %v612 = vpop.f32.mrf.mxu0
          %613 = vmatprep.mubr.bf16.mxu0 0
          %614 = vmatmul.mubr.bf16.gmra.mxu0 %v565
          %v615 = vpop.f32.mrf.mxu0
          %v616 = vadd.f32 0.0, %v615
          %v617 = vpop.f32.mrf.mxu0
          %v618 = vpop.f32.mrf.mxu0
          %v619 = vadd.f32 0.0, %v618
          %v620 = vpop.f32.mrf.mxu0
          %621 = vmatprep.mubr.bf16.mxu0 0
          %622 = vmatmul.mubr.bf16.gmra.mxu0 %v568
          %v623 = vpop.f32.mrf.mxu0
          %v624 = vadd.f32 0.0, %v623
          %v625 = vpop.f32.mrf.mxu0
          %v626 = vpop.f32.mrf.mxu0
          %v627 = vadd.f32 0.0, %v626
          %v628 = vpop.f32.mrf.mxu0
          %629 = vmatprep.mubr.bf16.mxu0 0
          %630 = vmatmul.mubr.bf16.gmra.mxu0 %v571
          %v631 = vpop.f32.mrf.mxu0
          %v632 = vadd.f32 0.0, %v631
          %v633 = vpop.f32.mrf.mxu0
          %v634 = vpop.f32.mrf.mxu0
          %v635 = vadd.f32 0.0, %v634
          %v636 = vpop.f32.mrf.mxu0
          %637 = vdwg.mxu0
          %v638 = vpack.c.bf16 %v611, %v608
          %v639 = vpack.c.bf16 %v619, %v616
          %v640 = vpack.c.bf16 %v627, %v624
          %v641 = vpack.c.bf16 %v635, %v632
          %v646 = vunpack.c.l.b16 %v638
          %v647 = vunpack.c.h.b16 %v638
          %v648 = vunpack.c.l.b16 %v639
          %v649 = vunpack.c.h.b16 %v639
          %v650 = vunpack.c.l.b16 %v640
          %v651 = vunpack.c.h.b16 %v640
          %v652 = vunpack.c.l.b16 %v641
          %v653 = vunpack.c.h.b16 %v641
          %v654 = vpack.c.b16 %v646, %v646
          %v655 = vpack.c.b16 %v647, %v647
          %v656 = vpack.c.b16 %v648, %v648
          %v657 = vpack.c.b16 %v649, %v649
          %v658 = vpack.c.b16 %v650, %v650
          %v659 = vpack.c.b16 %v651, %v651
          %v660 = vpack.c.b16 %v652, %v652
          %v661 = vpack.c.b16 %v653, %v653
          %vm670 = vcmask 125952
          %671 = vst.msk [vmem:[#allocation2] sm:$0xf] %vm670, %v654
          %672 = vst.msk [vmem:[#allocation2 + $0x4] sm:$0xf] %vm670, %v655
          %673 = vst.msk [vmem:[#allocation2 + $0x8] sm:$0xf] %vm670, %v656
          %674 = vst.msk [vmem:[#allocation2 + $0xc] sm:$0xf] %vm670, %v657
          %675 = vst.msk [vmem:[#allocation2 + $0x10] sm:$0xf] %vm670, %v658
          %676 = vst.msk [vmem:[#allocation2 + $0x14] sm:$0xf] %vm670, %v659
          %677 = vst.msk [vmem:[#allocation2 + $0x18] sm:$0xf] %vm670, %v660
          %678 = vst.msk [vmem:[#allocation2 + $0x1c] sm:$0xf] %vm670, %v661
          %v679 = vld [vmem:[%s504] sm:$0xf]
          %v680 = vld [vmem:[%s504 + $0x4] sm:$0xf]
          %v681 = vld [vmem:[%s4] sm:$0xf]
          %v682 = vld [vmem:[%s4 + $0x4] sm:$0xf]
          %v683 = vld [vmem:[%s4 + $0x8] sm:$0xf]
          %v684 = vld [vmem:[%s4 + $0xc] sm:$0xf]
          %v687 = vunpack.c.l.b16 %v679
          %v688 = vunpack.c.l.b16 %v680
          %v689 = vpack.c.b16 %v688, %v687
          %v694 = vunpack.c.l.b16 %v681
          %v695 = vunpack.c.l.b16 %v682
          %v696 = vunpack.c.l.b16 %v683
          %v697 = vunpack.c.l.b16 %v684
          %v698 = vpack.c.b16 %v695, %v694
          %v699 = vpack.c.b16 %v697, %v696
          %v703 = vsel %vm560, %v689, 0
          %705 = vmatprep.subr.bf16.mxu0 0
          %706 = vmatpush1.bf16.msra.mxu0 0
          %707 = vmatprep.subr.bf16.mxu0 0
          %708 = vmatpush1.bf16.msra.mxu0 0
          %709 = vmatprep.subr.bf16.mxu0 0
          %710 = vmatpush1.bf16.msra.mxu0 0
          %711 = vmatprep.subr.bf16.mxu0 0
          %712 = vmatpush1.bf16.msra.mxu0 0
          %713 = vmatprep.subr.bf16.mxu0 0
          %714 = vmatpush1.bf16.msra.mxu0 0
          %715 = vmatprep.subr.bf16.mxu0 0
          %716 = vmatpush1.bf16.msra.mxu0 0
          %717 = vmatprep.subr.bf16.mxu0 0
          %718 = vmatpush1.bf16.msra.mxu0 %v699
          %719 = vmatprep.subr.bf16.mxu0 0
          %720 = vmatpush1.bf16.msra.mxu0 %v698
          %721 = vmatprep.subr.bf16.mxu0 0
          %722 = vmatpush2.bf16.msra.mxu0 0
          %723 = vmatprep.subr.bf16.mxu0 0
          %724 = vmatpush2.bf16.msra.mxu0 0
          %725 = vmatprep.subr.bf16.mxu0 0
          %726 = vmatpush2.bf16.msra.mxu0 0
          %727 = vmatprep.subr.bf16.mxu0 0
          %728 = vmatpush2.bf16.msra.mxu0 0
          %729 = vmatprep.subr.bf16.mxu0 0
          %730 = vmatpush2.bf16.msra.mxu0 0
          %731 = vmatprep.subr.bf16.mxu0 0
          %732 = vmatpush2.bf16.msra.mxu0 0
          %733 = vmatprep.subr.bf16.mxu0 0
          %734 = vmatpush2.bf16.msra.mxu0 0
          %735 = vmatprep.subr.bf16.mxu0 0
          %736 = vmatpush2.bf16.msra.mxu0 0
          %737 = vmatprep.mubr.bf16.mxu0 0
          %738 = vmatmul.mubr.bf16.gmra.mxu0 %v703
          %v739 = vpop.f32.mrf.mxu0
          %v740 = vadd.f32 0.0, %v739
          %v741 = vpop.f32.mrf.mxu0
          %v742 = vpop.f32.mrf.mxu0
          %v743 = vadd.f32 0.0, %v742
          %v744 = vpop.f32.mrf.mxu0
          %745 = vdwg.mxu0
          %v746 = vpack.c.bf16 %v743, %v740
          %v748 = vunpack.c.l.b16 %v746
          %v749 = vunpack.c.h.b16 %v746
          %v750 = vpack.c.b16 %v748, %v748
          %v751 = vpack.c.b16 %v749, %v749
          %vm754 = vcmask 519168
          %755 = vst.msk [vmem:[#allocation3] sm:$0xf] %vm754, %v750
          %756 = vst.msk [vmem:[#allocation3 + $0x4] sm:$0xf] %vm754, %v751
        $region92: #{tpu_custom_call.1} parent=67 // pred_fallthru
          _
        %s757 = smul.u32 %s34, 16
        %s758 = sshra.s32 %s757, 3
        %s759 = sand.u32 %s757, 7
        %s760 = smul.addr %s758, 4
        %s761 = scalar_lea.vmem %s504, %s760
        %v762 = vld [vmem:[%s761] sm:$0xf]
        %v763 = vld [vmem:[%s761 + $0x4] sm:$0xf]
        %v764 = vld [vmem:[%s2] sm:$0xf]
        %v765 = vld [vmem:[%s2 + $0x4] sm:$0xf]
        %v766 = vld [vmem:[%s2 + $0x8] sm:$0xf]
        %v767 = vld [vmem:[%s2 + $0xc] sm:$0xf]
        %v770 = vunpack.c.l.b16 %v762
        %v771 = vunpack.c.l.b16 %v763
        %v772 = vpack.c.b16 %v771, %v770
        %v777 = vunpack.c.l.b16 %v764
        %v778 = vunpack.c.l.b16 %v765
        %v779 = vunpack.c.l.b16 %v766
        %v780 = vunpack.c.l.b16 %v767
        %v781 = vpack.c.b16 %v778, %v777
        %v782 = vpack.c.b16 %v780, %v779
        %vm785 = vcmask 261120
        %v787 = vsel %vm785, %v772, 0
        %789 = vmatprep.subr.bf16.mxu0 0
        %790 = vmatpush1.bf16.msra.mxu0 0
        %791 = vmatprep.subr.bf16.mxu0 0
        %792 = vmatpush1.bf16.msra.mxu0 0
        %793 = vmatprep.subr.bf16.mxu0 0
        %794 = vmatpush1.bf16.msra.mxu0 0
        %795 = vmatprep.subr.bf16.mxu0 0
        %796 = vmatpush1.bf16.msra.mxu0 0
        %797 = vmatprep.subr.bf16.mxu0 0
        %798 = vmatpush1.bf16.msra.mxu0 0
        %799 = vmatprep.subr.bf16.mxu0 0
        %800 = vmatpush1.bf16.msra.mxu0 0
        %801 = vmatprep.subr.bf16.mxu0 0
        %802 = vmatpush1.bf16.msra.mxu0 %v782
        %803 = vmatprep.subr.bf16.mxu0 0
        %804 = vmatpush1.bf16.msra.mxu0 %v781
        %805 = vmatprep.subr.bf16.mxu0 0
        %806 = vmatpush2.bf16.msra.mxu0 0
        %807 = vmatprep.subr.bf16.mxu0 0
        %808 = vmatpush2.bf16.msra.mxu0 0
        %809 = vmatprep.subr.bf16.mxu0 0
        %810 = vmatpush2.bf16.msra.mxu0 0
        %811 = vmatprep.subr.bf16.mxu0 0
        %812 = vmatpush2.bf16.msra.mxu0 0
        %813 = vmatprep.subr.bf16.mxu0 0
        %814 = vmatpush2.bf16.msra.mxu0 0
        %815 = vmatprep.subr.bf16.mxu0 0
        %816 = vmatpush2.bf16.msra.mxu0 0
        %817 = vmatprep.subr.bf16.mxu0 0
        %818 = vmatpush2.bf16.msra.mxu0 0
        %819 = vmatprep.subr.bf16.mxu0 0
        %820 = vmatpush2.bf16.msra.mxu0 0
        %821 = vmatprep.mubr.bf16.mxu0 0
        %822 = vmatmul.mubr.bf16.gmra.mxu0 %v787
        %v823 = vpop.f32.mrf.mxu0
        %v824 = vadd.f32 0.0, %v823
        %v825 = vpop.f32.mrf.mxu0
        %v826 = vpop.f32.mrf.mxu0
        %v827 = vadd.f32 0.0, %v826
        %v828 = vpop.f32.mrf.mxu0
        %829 = vdwg.mxu0
        %v830 = vpack.c.bf16 %v827, %v824
        %v832 = vunpack.c.l.b16 %v830
        %v833 = vunpack.c.h.b16 %v830
        %v834 = vpack.c.b16 %v832, %v832
        %v835 = vpack.c.b16 %v833, %v833
        %vm838 = vcmask 519168
        %839 = vst.msk [vmem:[#allocation4] sm:$0xf] %vm838, %v834
        %840 = vst.msk [vmem:[#allocation4 + $0x4] sm:$0xf] %vm838, %v835
        %v841 = vld [vmem:[#allocation4] sm:$0xf]
        %v842 = vld [vmem:[#allocation4 + $0x4] sm:$0xf]
        %v843 = vld [vmem:[#allocation2] sm:$0xf]
        %v844 = vld [vmem:[#allocation2 + $0x4] sm:$0xf]
        %v847 = vunpack.c.l.b16 %v841
        %v848 = vunpack.c.l.b16 %v842
        %v849 = vpack.c.b16 %v848, %v847
        %v852 = vunpack.c.l.b16 %v843
        %v853 = vunpack.c.l.b16 %v844
        %v854 = vpack.c.b16 %v853, %v852
        %vm856 = vcmask 130048
        %v858 = vsel %vm856, %v849, 0
        %860 = vmatprep.subr.bf16.mxu0 0
        %861 = vmatpush1.bf16.msra.mxu0 0
        %862 = vmatprep.subr.bf16.mxu0 0
        %863 = vmatpush1.bf16.msra.mxu0 0
        %864 = vmatprep.subr.bf16.mxu0 0
        %865 = vmatpush1.bf16.msra.mxu0 0
        %866 = vmatprep.subr.bf16.mxu0 0
        %867 = vmatpush1.bf16.msra.mxu0 0
        %868 = vmatprep.subr.bf16.mxu0 0
        %869 = vmatpush1.bf16.msra.mxu0 0
        %870 = vmatprep.subr.bf16.mxu0 0
        %871 = vmatpush1.bf16.msra.mxu0 0
        %872 = vmatprep.subr.bf16.mxu0 0
        %873 = vmatpush1.bf16.msra.mxu0 0
        %874 = vmatprep.subr.bf16.mxu0 0
        %875 = vmatpush1.bf16.msra.mxu0 %v854
        %876 = vmatprep.subr.bf16.mxu0 0
        %877 = vmatpush2.bf16.msra.mxu0 0
        %878 = vmatprep.subr.bf16.mxu0 0
        %879 = vmatpush2.bf16.msra.mxu0 0
        %880 = vmatprep.subr.bf16.mxu0 0
        %881 = vmatpush2.bf16.msra.mxu0 0
        %882 = vmatprep.subr.bf16.mxu0 0
        %883 = vmatpush2.bf16.msra.mxu0 0
        %884 = vmatprep.subr.bf16.mxu0 0
        %885 = vmatpush2.bf16.msra.mxu0 0
        %886 = vmatprep.subr.bf16.mxu0 0
        %887 = vmatpush2.bf16.msra.mxu0 0
        %888 = vmatprep.subr.bf16.mxu0 0
        %889 = vmatpush2.bf16.msra.mxu0 0
        %890 = vmatprep.subr.bf16.mxu0 0
        %891 = vmatpush2.bf16.msra.mxu0 0
        %892 = vmatprep.mubr.bf16.mxu0 0
        %893 = vmatmul.mubr.bf16.gmra.mxu0 %v858
        %v894 = vpop.f32.mrf.mxu0
        %v895 = vadd.f32 0.0, %v894
        %v896 = vpop.f32.mrf.mxu0
        %v897 = vpop.f32.mrf.mxu0
        %v898 = vadd.f32 0.0, %v897
        %v899 = vpop.f32.mrf.mxu0
        %900 = vdwg.mxu0
        %v901 = vsel %vm856, %v895, -inf
        %902 = vmax.xlane.f32.xlu0 %v901
        %v903 = vpop.xlane.xlu0 %902
        %v904 = vsel %vm856, %v898, -inf
        %905 = vmax.xlane.f32.xlu0 %v904
        %v906 = vpop.xlane.xlu0 %905
        %v907 = vsub.f32 %v895, %v903
        %v908 = vsub.f32 %v898, %v906
        %v909 = vmul.f32 %v907, 1.442695
        %v910 = vpow.pop %v909
        %v911 = vmul.f32 %v908, 1.442695
        %v912 = vpow.pop %v911
        %v913 = vsel %vm856, %v910, 0.0
        %914 = vadd.xlane.f32.xlu0 %v913
        %v915 = vpop.xlane.xlu0 %914
        %v916 = vsel %vm856, %v912, 0.0
        %917 = vadd.xlane.f32.xlu0 %v916
        %v918 = vpop.xlane.xlu0 %917
        %v919 = vrcp.pop %v915
        %v920 = vrcp.pop %v918
        %v921 = vmul.f32 %v910, %v919
        %v922 = vmul.f32 %v912, %v920
        %v923 = vpack.c.bf16 %v922, %v921
        %v925 = vunpack.c.l.b16 %v923
        %v926 = vunpack.c.h.b16 %v923
        %v927 = vpack.c.b16 %v925, %v925
        %v928 = vpack.c.b16 %v926, %v926
        %vm931 = vcmask 125952
        %932 = vst.msk [vmem:[#allocation5] sm:$0xf] %vm931, %v927
        %933 = vst.msk [vmem:[#allocation5 + $0x4] sm:$0xf] %vm931, %v928
        %v934 = vunpack.c.l.bf16 %v923
        %v935 = vunpack.c.h.bf16 %v923
        %s936 = sld [smem:[#allocation10]]
        %v937 = vstv %s936
        %v938 = vmul.f32 %v934, %v937
        %v939 = vmul.f32 %v935, %v937
        %v940 = vld [vmem:[#allocation4] sm:$0xf]
        %v941 = vld [vmem:[#allocation4 + $0x4] sm:$0xf]
        %v942 = vld [vmem:[#allocation2 + $0x8] sm:$0xf]
        %v943 = vld [vmem:[#allocation2 + $0xc] sm:$0xf]
        %v946 = vunpack.c.l.b16 %v940
        %v947 = vunpack.c.l.b16 %v941
        %v948 = vpack.c.b16 %v947, %v946
        %949 = vrot.lane.b32.xlu0 %v948, 112
        %v950 = vpop.permute.xlu0 %949
        %v953 = vunpack.c.l.b16 %v942
        %v954 = vunpack.c.l.b16 %v943
        %v955 = vpack.c.b16 %v954, %v953
        %v958 = vsel %vm856, %v950, 0
        %960 = vmatprep.subr.bf16.mxu0 0
        %961 = vmatpush1.bf16.msra.mxu0 0
        %962 = vmatprep.subr.bf16.mxu0 0
        %963 = vmatpush1.bf16.msra.mxu0 0
        %964 = vmatprep.subr.bf16.mxu0 0
        %965 = vmatpush1.bf16.msra.mxu0 0
        %966 = vmatprep.subr.bf16.mxu0 0
        %967 = vmatpush1.bf16.msra.mxu0 0
        %968 = vmatprep.subr.bf16.mxu0 0
        %969 = vmatpush1.bf16.msra.mxu0 0
        %970 = vmatprep.subr.bf16.mxu0 0
        %971 = vmatpush1.bf16.msra.mxu0 0
        %972 = vmatprep.subr.bf16.mxu0 0
        %973 = vmatpush1.bf16.msra.mxu0 0
        %974 = vmatprep.subr.bf16.mxu0 0
        %975 = vmatpush1.bf16.msra.mxu0 %v955
        %976 = vmatprep.subr.bf16.mxu0 0
        %977 = vmatpush2.bf16.msra.mxu0 0
        %978 = vmatprep.subr.bf16.mxu0 0
        %979 = vmatpush2.bf16.msra.mxu0 0
        %980 = vmatprep.subr.bf16.mxu0 0
        %981 = vmatpush2.bf16.msra.mxu0 0
        %982 = vmatprep.subr.bf16.mxu0 0
        %983 = vmatpush2.bf16.msra.mxu0 0
        %984 = vmatprep.subr.bf16.mxu0 0
        %985 = vmatpush2.bf16.msra.mxu0 0
        %986 = vmatprep.subr.bf16.mxu0 0
        %987 = vmatpush2.bf16.msra.mxu0 0
        %988 = vmatprep.subr.bf16.mxu0 0
        %989 = vmatpush2.bf16.msra.mxu0 0
        %990 = vmatprep.subr.bf16.mxu0 0
        %991 = vmatpush2.bf16.msra.mxu0 0
        %992 = vmatprep.mubr.bf16.mxu0 0
        %993 = vmatmul.mubr.bf16.gmra.mxu0 %v958
        %v994 = vpop.f32.mrf.mxu0
        %v995 = vadd.f32 0.0, %v994
        %v996 = vpop.f32.mrf.mxu0
        %v997 = vpop.f32.mrf.mxu0
        %v998 = vadd.f32 0.0, %v997
        %v999 = vpop.f32.mrf.mxu0
        %1000 = vdwg.mxu0
        %v1001 = vsel %vm856, %v995, -inf
        %1002 = vmax.xlane.f32.xlu0 %v1001
        %v1003 = vpop.xlane.xlu0 %1002
        %v1004 = vsel %vm856, %v998, -inf
        %1005 = vmax.xlane.f32.xlu0 %v1004
        %v1006 = vpop.xlane.xlu0 %1005
        %v1007 = vsub.f32 %v995, %v1003
        %v1008 = vsub.f32 %v998, %v1006
        %v1009 = vmul.f32 %v1007, 1.442695
        %v1010 = vpow.pop %v1009
        %v1011 = vmul.f32 %v1008, 1.442695
        %v1012 = vpow.pop %v1011
        %v1013 = vsel %vm856, %v1010, 0.0
        %1014 = vadd.xlane.f32.xlu0 %v1013
        %v1015 = vpop.xlane.xlu0 %1014
        %v1016 = vsel %vm856, %v1012, 0.0
        %1017 = vadd.xlane.f32.xlu0 %v1016
        %v1018 = vpop.xlane.xlu0 %1017
        %v1019 = vrcp.pop %v1015
        %v1020 = vrcp.pop %v1018
        %v1021 = vmul.f32 %v1010, %v1019
        %v1022 = vmul.f32 %v1012, %v1020
        %v1023 = vpack.c.bf16 %v1022, %v1021
        %v1025 = vunpack.c.l.b16 %v1023
        %v1026 = vunpack.c.h.b16 %v1023
        %v1027 = vpack.c.b16 %v1025, %v1025
        %v1028 = vpack.c.b16 %v1026, %v1026
        %s1031 = scalar_lea.vmem [#allocation5], 8
        %1032 = vst.msk [vmem:[%s1031] sm:$0xf] %vm931, %v1027
        %1033 = vst.msk [vmem:[%s1031 + $0x4] sm:$0xf] %vm931, %v1028
        %v1034 = vunpack.c.l.bf16 %v1023
        %v1035 = vunpack.c.h.bf16 %v1023
        %s1036 = sld [smem:[#allocation10 + $0x1]]
        %v1037 = vstv %s1036
        %v1038 = vmul.f32 %v1034, %v1037
        %v1039 = vmul.f32 %v1035, %v1037
        %v1040 = vadd.f32 %v938, %v1038
        %v1041 = vadd.f32 %v939, %v1039
        %v1042 = vld [vmem:[#allocation4] sm:$0xf]
        %v1043 = vld [vmem:[#allocation4 + $0x4] sm:$0xf]
        %v1044 = vld [vmem:[#allocation2 + $0x10] sm:$0xf]
        %v1045 = vld [vmem:[#allocation2 + $0x14] sm:$0xf]
        %v1048 = vunpack.c.l.b16 %v1042
        %v1049 = vunpack.c.l.b16 %v1043
        %v1050 = vpack.c.b16 %v1049, %v1048
        %1051 = vrot.lane.b32.xlu0 %v1050, 96
        %v1052 = vpop.permute.xlu0 %1051
        %v1055 = vunpack.c.l.b16 %v1044
        %v1056 = vunpack.c.l.b16 %v1045
        %v1057 = vpack.c.b16 %v1056, %v1055
        %v1060 = vsel %vm856, %v1052, 0
        %1062 = vmatprep.subr.bf16.mxu0 0
        %1063 = vmatpush1.bf16.msra.mxu0 0
        %1064 = vmatprep.subr.bf16.mxu0 0
        %1065 = vmatpush1.bf16.msra.mxu0 0
        %1066 = vmatprep.subr.bf16.mxu0 0
        %1067 = vmatpush1.bf16.msra.mxu0 0
        %1068 = vmatprep.subr.bf16.mxu0 0
        %1069 = vmatpush1.bf16.msra.mxu0 0
        %1070 = vmatprep.subr.bf16.mxu0 0
        %1071 = vmatpush1.bf16.msra.mxu0 0
        %1072 = vmatprep.subr.bf16.mxu0 0
        %1073 = vmatpush1.bf16.msra.mxu0 0
        %1074 = vmatprep.subr.bf16.mxu0 0
        %1075 = vmatpush1.bf16.msra.mxu0 0
        %1076 = vmatprep.subr.bf16.mxu0 0
        %1077 = vmatpush1.bf16.msra.mxu0 %v1057
        %1078 = vmatprep.subr.bf16.mxu0 0
        %1079 = vmatpush2.bf16.msra.mxu0 0
        %1080 = vmatprep.subr.bf16.mxu0 0
        %1081 = vmatpush2.bf16.msra.mxu0 0
        %1082 = vmatprep.subr.bf16.mxu0 0
        %1083 = vmatpush2.bf16.msra.mxu0 0
        %1084 = vmatprep.subr.bf16.mxu0 0
        %1085 = vmatpush2.bf16.msra.mxu0 0
        %1086 = vmatprep.subr.bf16.mxu0 0
        %1087 = vmatpush2.bf16.msra.mxu0 0
        %1088 = vmatprep.subr.bf16.mxu0 0
        %1089 = vmatpush2.bf16.msra.mxu0 0
        %1090 = vmatprep.subr.bf16.mxu0 0
        %1091 = vmatpush2.bf16.msra.mxu0 0
        %1092 = vmatprep.subr.bf16.mxu0 0
        %1093 = vmatpush2.bf16.msra.mxu0 0
        %1094 = vmatprep.mubr.bf16.mxu0 0
        %1095 = vmatmul.mubr.bf16.gmra.mxu0 %v1060
        %v1096 = vpop.f32.mrf.mxu0
        %v1097 = vadd.f32 0.0, %v1096
        %v1098 = vpop.f32.mrf.mxu0
        %v1099 = vpop.f32.mrf.mxu0
        %v1100 = vadd.f32 0.0, %v1099
        %v1101 = vpop.f32.mrf.mxu0
        %1102 = vdwg.mxu0
        %v1103 = vsel %vm856, %v1097, -inf
        %1104 = vmax.xlane.f32.xlu0 %v1103
        %v1105 = vpop.xlane.xlu0 %1104
        %v1106 = vsel %vm856, %v1100, -inf
        %1107 = vmax.xlane.f32.xlu0 %v1106
        %v1108 = vpop.xlane.xlu0 %1107
        %v1109 = vsub.f32 %v1097, %v1105
        %v1110 = vsub.f32 %v1100, %v1108
        %v1111 = vmul.f32 %v1109, 1.442695
        %v1112 = vpow.pop %v1111
        %v1113 = vmul.f32 %v1110, 1.442695
        %v1114 = vpow.pop %v1113
        %v1115 = vsel %vm856, %v1112, 0.0
        %1116 = vadd.xlane.f32.xlu0 %v1115
        %v1117 = vpop.xlane.xlu0 %1116
        %v1118 = vsel %vm856, %v1114, 0.0
        %1119 = vadd.xlane.f32.xlu0 %v1118
        %v1120 = vpop.xlane.xlu0 %1119
        %v1121 = vrcp.pop %v1117
        %v1122 = vrcp.pop %v1120
        %v1123 = vmul.f32 %v1112, %v1121
        %v1124 = vmul.f32 %v1114, %v1122
        %v1125 = vpack.c.bf16 %v1124, %v1123
        %v1127 = vunpack.c.l.b16 %v1125
        %v1128 = vunpack.c.h.b16 %v1125
        %v1129 = vpack.c.b16 %v1127, %v1127
        %v1130 = vpack.c.b16 %v1128, %v1128
        %s1133 = scalar_lea.vmem [#allocation5], 16
        %1134 = vst.msk [vmem:[%s1133] sm:$0xf] %vm931, %v1129
        %1135 = vst.msk [vmem:[%s1133 + $0x4] sm:$0xf] %vm931, %v1130
        %v1136 = vunpack.c.l.bf16 %v1125
        %v1137 = vunpack.c.h.bf16 %v1125
        %s1138 = sld [smem:[#allocation10 + $0x2]]
        %v1139 = vstv %s1138
        %v1140 = vmul.f32 %v1136, %v1139
        %v1141 = vmul.f32 %v1137, %v1139
        %v1142 = vadd.f32 %v1040, %v1140
        %v1143 = vadd.f32 %v1041, %v1141
        %v1144 = vld [vmem:[#allocation4] sm:$0xf]
        %v1145 = vld [vmem:[#allocation4 + $0x4] sm:$0xf]
        %v1146 = vld [vmem:[#allocation2 + $0x18] sm:$0xf]
        %v1147 = vld [vmem:[#allocation2 + $0x1c] sm:$0xf]
        %v1150 = vunpack.c.l.b16 %v1144
        %v1151 = vunpack.c.l.b16 %v1145
        %v1152 = vpack.c.b16 %v1151, %v1150
        %1153 = vrot.lane.b32.xlu0 %v1152, 80
        %v1154 = vpop.permute.xlu0 %1153
        %v1157 = vunpack.c.l.b16 %v1146
        %v1158 = vunpack.c.l.b16 %v1147
        %v1159 = vpack.c.b16 %v1158, %v1157
        %v1162 = vsel %vm856, %v1154, 0
        %1164 = vmatprep.subr.bf16.mxu0 0
        %1165 = vmatpush1.bf16.msra.mxu0 0
        %1166 = vmatprep.subr.bf16.mxu0 0
        %1167 = vmatpush1.bf16.msra.mxu0 0
        %1168 = vmatprep.subr.bf16.mxu0 0
        %1169 = vmatpush1.bf16.msra.mxu0 0
        %1170 = vmatprep.subr.bf16.mxu0 0
        %1171 = vmatpush1.bf16.msra.mxu0 0
        %1172 = vmatprep.subr.bf16.mxu0 0
        %1173 = vmatpush1.bf16.msra.mxu0 0
        %1174 = vmatprep.subr.bf16.mxu0 0
        %1175 = vmatpush1.bf16.msra.mxu0 0
        %1176 = vmatprep.subr.bf16.mxu0 0
        %1177 = vmatpush1.bf16.msra.mxu0 0
        %1178 = vmatprep.subr.bf16.mxu0 0
        %1179 = vmatpush1.bf16.msra.mxu0 %v1159
        %1180 = vmatprep.subr.bf16.mxu0 0
        %1181 = vmatpush2.bf16.msra.mxu0 0
        %1182 = vmatprep.subr.bf16.mxu0 0
        %1183 = vmatpush2.bf16.msra.mxu0 0
        %1184 = vmatprep.subr.bf16.mxu0 0
        %1185 = vmatpush2.bf16.msra.mxu0 0
        %1186 = vmatprep.subr.bf16.mxu0 0
        %1187 = vmatpush2.bf16.msra.mxu0 0
        %1188 = vmatprep.subr.bf16.mxu0 0
        %1189 = vmatpush2.bf16.msra.mxu0 0
        %1190 = vmatprep.subr.bf16.mxu0 0
        %1191 = vmatpush2.bf16.msra.mxu0 0
        %1192 = vmatprep.subr.bf16.mxu0 0
        %1193 = vmatpush2.bf16.msra.mxu0 0
        %1194 = vmatprep.subr.bf16.mxu0 0
        %1195 = vmatpush2.bf16.msra.mxu0 0
        %1196 = vmatprep.mubr.bf16.mxu0 0
        %1197 = vmatmul.mubr.bf16.gmra.mxu0 %v1162
        %v1198 = vpop.f32.mrf.mxu0
        %v1199 = vadd.f32 0.0, %v1198
        %v1200 = vpop.f32.mrf.mxu0
        %v1201 = vpop.f32.mrf.mxu0
        %v1202 = vadd.f32 0.0, %v1201
        %v1203 = vpop.f32.mrf.mxu0
        %1204 = vdwg.mxu0
        %v1205 = vsel %vm856, %v1199, -inf
        %1206 = vmax.xlane.f32.xlu0 %v1205
        %v1207 = vpop.xlane.xlu0 %1206
        %v1208 = vsel %vm856, %v1202, -inf
        %1209 = vmax.xlane.f32.xlu0 %v1208
        %v1210 = vpop.xlane.xlu0 %1209
        %v1211 = vsub.f32 %v1199, %v1207
        %v1212 = vsub.f32 %v1202, %v1210
        %v1213 = vmul.f32 %v1211, 1.442695
        %v1214 = vpow.pop %v1213
        %v1215 = vmul.f32 %v1212, 1.442695
        %v1216 = vpow.pop %v1215
        %v1217 = vsel %vm856, %v1214, 0.0
        %1218 = vadd.xlane.f32.xlu0 %v1217
        %v1219 = vpop.xlane.xlu0 %1218
        %v1220 = vsel %vm856, %v1216, 0.0
        %1221 = vadd.xlane.f32.xlu0 %v1220
        %v1222 = vpop.xlane.xlu0 %1221
        %v1223 = vrcp.pop %v1219
        %v1224 = vrcp.pop %v1222
        %v1225 = vmul.f32 %v1214, %v1223
        %v1226 = vmul.f32 %v1216, %v1224
        %v1227 = vpack.c.bf16 %v1226, %v1225
        %v1229 = vunpack.c.l.b16 %v1227
        %v1230 = vunpack.c.h.b16 %v1227
        %v1231 = vpack.c.b16 %v1229, %v1229
        %v1232 = vpack.c.b16 %v1230, %v1230
        %s1235 = scalar_lea.vmem [#allocation5], 24
        %1236 = vst.msk [vmem:[%s1235] sm:$0xf] %vm931, %v1231
        %1237 = vst.msk [vmem:[%s1235 + $0x4] sm:$0xf] %vm931, %v1232
        %v1238 = vunpack.c.l.bf16 %v1227
        %v1239 = vunpack.c.h.bf16 %v1227
        %s1240 = sld [smem:[#allocation10 + $0x3]]
        %v1241 = vstv %s1240
        %v1242 = vmul.f32 %v1238, %v1241
        %v1243 = vmul.f32 %v1239, %v1241
        %v1244 = vadd.f32 %v1142, %v1242
        %v1245 = vadd.f32 %v1143, %v1243
        %v1246 = vld [vmem:[#allocation5] sm:$0xf]
        %v1247 = vld [vmem:[#allocation5 + $0x4] sm:$0xf]
        %v1248 = vunpack.c.l.bf16 %v1246
        %v1249 = vunpack.c.l.bf16 %v1247
        %v1250 = vmul.f32 %v1248, %v1248
        %v1251 = vmul.f32 %v1249, %v1249
        %s1252 = sld [smem:[#allocation12]]
        %v1253 = vstv %s1252
        %v1254 = vmul.f32 %v1250, %v1253
        %v1255 = vmul.f32 %v1251, %v1253
        %v1256 = vld [vmem:[%s1031] sm:$0xf]
        %v1257 = vld [vmem:[%s1031 + $0x4] sm:$0xf]
        %v1258 = vunpack.c.l.bf16 %v1256
        %v1259 = vunpack.c.l.bf16 %v1257
        %v1260 = vmul.f32 %v1248, %v1258
        %v1261 = vmul.f32 %v1249, %v1259
        %s1262 = sld [smem:[#allocation12 + $0x1]]
        %s1263 = smul.f32 %s1262, 2.0
        %v1264 = vstv %s1263
        %v1265 = vmul.f32 %v1260, %v1264
        %v1266 = vmul.f32 %v1261, %v1264
        %v1267 = vadd.f32 %v1254, %v1265
        %v1268 = vadd.f32 %v1255, %v1266
        %v1269 = vld [vmem:[%s1133] sm:$0xf]
        %v1270 = vld [vmem:[%s1133 + $0x4] sm:$0xf]
        %v1271 = vunpack.c.l.bf16 %v1269
        %v1272 = vunpack.c.l.bf16 %v1270
        %v1273 = vmul.f32 %v1248, %v1271
        %v1274 = vmul.f32 %v1249, %v1272
        %s1275 = sld [smem:[#allocation12 + $0x2]]
        %s1276 = smul.f32 %s1275, 2.0
        %v1277 = vstv %s1276
        %v1278 = vmul.f32 %v1273, %v1277
        %v1279 = vmul.f32 %v1274, %v1277
        %v1280 = vadd.f32 %v1267, %v1278
        %v1281 = vadd.f32 %v1268, %v1279
        %v1282 = vld [vmem:[%s1235] sm:$0xf]
        %v1283 = vld [vmem:[%s1235 + $0x4] sm:$0xf]
        %v1284 = vunpack.c.l.bf16 %v1282
        %v1285 = vunpack.c.l.bf16 %v1283
        %v1286 = vmul.f32 %v1248, %v1284
        %v1287 = vmul.f32 %v1249, %v1285
        %s1288 = sld [smem:[#allocation12 + $0x3]]
        %s1289 = smul.f32 %s1288, 2.0
        %v1290 = vstv %s1289
        %v1291 = vmul.f32 %v1286, %v1290
        %v1292 = vmul.f32 %v1287, %v1290
        %v1293 = vadd.f32 %v1280, %v1291
        %v1294 = vadd.f32 %v1281, %v1292
        %v1295 = vmul.f32 %v1258, %v1258
        %v1296 = vmul.f32 %v1259, %v1259
        %s1297 = sld [smem:[#allocation12 + $0x81]]
        %v1298 = vstv %s1297
        %v1299 = vmul.f32 %v1295, %v1298
        %v1300 = vmul.f32 %v1296, %v1298
        %v1301 = vadd.f32 %v1293, %v1299
        %v1302 = vadd.f32 %v1294, %v1300
        %v1303 = vmul.f32 %v1258, %v1271
        %v1304 = vmul.f32 %v1259, %v1272
        %s1305 = sld [smem:[#allocation12 + $0x82]]
        %s1306 = smul.f32 %s1305, 2.0
        %v1307 = vstv %s1306
        %v1308 = vmul.f32 %v1303, %v1307
        %v1309 = vmul.f32 %v1304, %v1307
        %v1310 = vadd.f32 %v1301, %v1308
        %v1311 = vadd.f32 %v1302, %v1309
        %v1312 = vmul.f32 %v1258, %v1284
        %v1313 = vmul.f32 %v1259, %v1285
        %s1314 = sld [smem:[#allocation12 + $0x83]]
        %s1315 = smul.f32 %s1314, 2.0
        %v1316 = vstv %s1315
        %v1317 = vmul.f32 %v1312, %v1316
        %v1318 = vmul.f32 %v1313, %v1316
        %v1319 = vadd.f32 %v1310, %v1317
        %v1320 = vadd.f32 %v1311, %v1318
        %v1321 = vmul.f32 %v1271, %v1271
        %v1322 = vmul.f32 %v1272, %v1272
        %s1323 = sld [smem:[#allocation12 + $0x102]]
        %v1324 = vstv %s1323
        %v1325 = vmul.f32 %v1321, %v1324
        %v1326 = vmul.f32 %v1322, %v1324
        %v1327 = vadd.f32 %v1319, %v1325
        %v1328 = vadd.f32 %v1320, %v1326
        %v1329 = vmul.f32 %v1271, %v1284
        %v1330 = vmul.f32 %v1272, %v1285
        %s1331 = sld [smem:[#allocation12 + $0x103]]
        %s1332 = smul.f32 %s1331, 2.0
        %v1333 = vstv %s1332
        %v1334 = vmul.f32 %v1329, %v1333
        %v1335 = vmul.f32 %v1330, %v1333
        %v1336 = vadd.f32 %v1327, %v1334
        %v1337 = vadd.f32 %v1328, %v1335
        %v1338 = vmul.f32 %v1284, %v1284
        %v1339 = vmul.f32 %v1285, %v1285
        %s1340 = sld [smem:[#allocation12 + $0x183]]
        %v1341 = vstv %s1340
        %v1342 = vmul.f32 %v1338, %v1341
        %v1343 = vmul.f32 %v1339, %v1341
        %v1344 = vadd.f32 %v1336, %v1342
        %v1345 = vadd.f32 %v1337, %v1343
        %v1346 = vmul.f32 %v1244, %v1244
        %v1347 = vmul.f32 %v1245, %v1245
        %v1348 = vsub.f32 %v1344, %v1346
        %v1349 = vsub.f32 %v1345, %v1347
        %v1350 = vmax.f32 %v1348, 0.0
        %v1351 = vmax.f32 %v1349, 0.0
        %v1352 = vadd.f32 %v1350, 1e-05
        %v1353 = vadd.f32 %v1351, 1e-05
        %v1354 = vrsqrt.pop %v1352
        %v1355 = vrsqrt.pop %v1353
        %s1356 = sld [smem:[#allocation7]]
        %v1357 = vstv %s1356
        %v1358 = vmul.f32 %v1248, %v1357
        %v1359 = vmul.f32 %v1249, %v1357
        %s1360 = sld [smem:[#allocation7 + $0x80]]
        %v1361 = vstv %s1360
        %v1362 = vmul.f32 %v1258, %v1361
        %v1363 = vmul.f32 %v1259, %v1361
        %v1364 = vadd.f32 %v1358, %v1362
        %v1365 = vadd.f32 %v1359, %v1363
        %s1366 = sld [smem:[#allocation7 + $0x100]]
        %v1367 = vstv %s1366
        %v1368 = vmul.f32 %v1271, %v1367
        %v1369 = vmul.f32 %v1272, %v1367
        %v1370 = vadd.f32 %v1364, %v1368
        %v1371 = vadd.f32 %v1365, %v1369
        %s1372 = sld [smem:[#allocation7 + $0x180]]
        %v1373 = vstv %s1372
        %v1374 = vmul.f32 %v1284, %v1373
        %v1375 = vmul.f32 %v1285, %v1373
        %v1376 = vadd.f32 %v1370, %v1374
        %v1377 = vadd.f32 %v1371, %v1375
        %v1378 = vsub.f32 %v1376, %v1244
        %v1379 = vsub.f32 %v1377, %v1245
        %v1380 = vmul.f32 %v1378, %v1354
        %v1381 = vmul.f32 %v1379, %v1355
        %s1382 = sld [smem:[#allocation13]]
        %v1383 = vstv %s1382
        %v1384 = vmul.f32 %v1380, %v1383
        %v1385 = vmul.f32 %v1381, %v1383
        %s1386 = sld [smem:[#allocation15]]
        %v1387 = vstv %s1386
        %v1388 = vadd.f32 %v1384, %v1387
        %v1389 = vadd.f32 %v1385, %v1387
        %v1390 = vpack.c.bf16 %v1389, %v1388
        %v1391 = vld [vmem:[#allocation3] sm:$0xf]
        %v1392 = vld [vmem:[#allocation3 + $0x4] sm:$0xf]
        %v1395 = vunpack.c.l.b16 %v1391
        %v1396 = vunpack.c.l.b16 %v1392
        %v1397 = vpack.c.b16 %v1396, %v1395
        %v1400 = vsel %vm856, %v1390, 0
        %1402 = vmatprep.subr.bf16.mxu0 0
        %1403 = vmatpush1.bf16.msra.mxu0 0
        %1404 = vmatprep.subr.bf16.mxu0 0
        %1405 = vmatpush1.bf16.msra.mxu0 0
        %1406 = vmatprep.subr.bf16.mxu0 0
        %1407 = vmatpush1.bf16.msra.mxu0 0
        %1408 = vmatprep.subr.bf16.mxu0 0
        %1409 = vmatpush1.bf16.msra.mxu0 0
        %1410 = vmatprep.subr.bf16.mxu0 0
        %1411 = vmatpush1.bf16.msra.mxu0 0
        %1412 = vmatprep.subr.bf16.mxu0 0
        %1413 = vmatpush1.bf16.msra.mxu0 0
        %1414 = vmatprep.subr.bf16.mxu0 0
        %1415 = vmatpush1.bf16.msra.mxu0 0
        %1416 = vmatprep.subr.bf16.mxu0 0
        %1417 = vmatpush1.bf16.msra.mxu0 %v1397
        %1418 = vmatprep.subr.bf16.mxu0 0
        %1419 = vmatpush2.bf16.msra.mxu0 0
        %1420 = vmatprep.subr.bf16.mxu0 0
        %1421 = vmatpush2.bf16.msra.mxu0 0
        %1422 = vmatprep.subr.bf16.mxu0 0
        %1423 = vmatpush2.bf16.msra.mxu0 0
        %1424 = vmatprep.subr.bf16.mxu0 0
        %1425 = vmatpush2.bf16.msra.mxu0 0
        %1426 = vmatprep.subr.bf16.mxu0 0
        %1427 = vmatpush2.bf16.msra.mxu0 0
        %1428 = vmatprep.subr.bf16.mxu0 0
        %1429 = vmatpush2.bf16.msra.mxu0 0
        %1430 = vmatprep.subr.bf16.mxu0 0
        %1431 = vmatpush2.bf16.msra.mxu0 0
        %1432 = vmatprep.subr.bf16.mxu0 0
        %1433 = vmatpush2.bf16.msra.mxu0 0
        %1434 = vmatprep.mubr.bf16.mxu0 0
        %1435 = vmatmul.mubr.bf16.gmra.mxu0 %v1400
        %v1436 = vpop.f32.mrf.mxu0
        %v1437 = vadd.f32 0.0, %v1436
        %v1438 = vpop.f32.mrf.mxu0
        %v1439 = vpop.f32.mrf.mxu0
        %v1440 = vadd.f32 0.0, %v1439
        %v1441 = vpop.f32.mrf.mxu0
        %1442 = vdwg.mxu0
        %v1443 = vpack.c.bf16 %v1440, %v1437
        %v1445 = vunpack.c.l.b16 %v1443
        %v1446 = vunpack.c.h.b16 %v1443
        %v1447 = vpack.c.b16 %v1445, %v1445
        %v1448 = vpack.c.b16 %v1446, %v1446
        %1451 = vst.msk [vmem:[#allocation6] sm:$0xf] %vm931, %v1447
        %1452 = vst.msk [vmem:[#allocation6 + $0x4] sm:$0xf] %vm931, %v1448
        %v1453 = vld [vmem:[#allocation5] sm:$0xf]
        %v1454 = vld [vmem:[#allocation5 + $0x4] sm:$0xf]
        %v1455 = vunpack.c.l.bf16 %v1453
        %v1456 = vunpack.c.l.bf16 %v1454
        %s1457 = sld [smem:[#allocation7 + $0x1]]
        %v1458 = vstv %s1457
        %v1459 = vmul.f32 %v1455, %v1458
        %v1460 = vmul.f32 %v1456, %v1458
        %v1461 = vld [vmem:[%s1031] sm:$0xf]
        %v1462 = vld [vmem:[%s1031 + $0x4] sm:$0xf]
        %v1463 = vunpack.c.l.bf16 %v1461
        %v1464 = vunpack.c.l.bf16 %v1462
        %s1465 = sld [smem:[#allocation7 + $0x81]]
        %v1466 = vstv %s1465
        %v1467 = vmul.f32 %v1463, %v1466
        %v1468 = vmul.f32 %v1464, %v1466
        %v1469 = vadd.f32 %v1459, %v1467
        %v1470 = vadd.f32 %v1460, %v1468
        %v1471 = vld [vmem:[%s1133] sm:$0xf]
        %v1472 = vld [vmem:[%s1133 + $0x4] sm:$0xf]
        %v1473 = vunpack.c.l.bf16 %v1471
        %v1474 = vunpack.c.l.bf16 %v1472
        %s1475 = sld [smem:[#allocation7 + $0x101]]
        %v1476 = vstv %s1475
        %v1477 = vmul.f32 %v1473, %v1476
        %v1478 = vmul.f32 %v1474, %v1476
        %v1479 = vadd.f32 %v1469, %v1477
        %v1480 = vadd.f32 %v1470, %v1478
        %v1481 = vld [vmem:[%s1235] sm:$0xf]
        %v1482 = vld [vmem:[%s1235 + $0x4] sm:$0xf]
        %v1483 = vunpack.c.l.bf16 %v1481
        %v1484 = vunpack.c.l.bf16 %v1482
        %s1485 = sld [smem:[#allocation7 + $0x181]]
        %v1486 = vstv %s1485
        %v1487 = vmul.f32 %v1483, %v1486
        %v1488 = vmul.f32 %v1484, %v1486
        %v1489 = vadd.f32 %v1479, %v1487
        %v1490 = vadd.f32 %v1480, %v1488
        %v1491 = vsub.f32 %v1489, %v1244
        %v1492 = vsub.f32 %v1490, %v1245
        %v1493 = vmul.f32 %v1491, %v1354
        %v1494 = vmul.f32 %v1492, %v1355
        %s1495 = sld [smem:[#allocation13 + $0x1]]
        %v1496 = vstv %s1495
        %v1497 = vmul.f32 %v1493, %v1496
        %v1498 = vmul.f32 %v1494, %v1496
        %s1499 = sld [smem:[#allocation15 + $0x1]]
        %v1500 = vstv %s1499
        %v1501 = vadd.f32 %v1497, %v1500
        %v1502 = vadd.f32 %v1498, %v1500
        %v1503 = vpack.c.bf16 %v1502, %v1501
        %v1504 = vld [vmem:[#allocation3] sm:$0xf]
        %v1505 = vld [vmem:[#allocation3 + $0x4] sm:$0xf]
        %v1508 = vunpack.c.l.b16 %v1504
        %v1509 = vunpack.c.l.b16 %v1505
        %v1510 = vpack.c.b16 %v1509, %v1508
        %1511 = vrot.lane.b32.xlu0 %v1510, 112
        %v1512 = vpop.permute.xlu0 %1511
        %v1515 = vsel %vm856, %v1503, 0
        %1517 = vmatprep.subr.bf16.mxu0 0
        %1518 = vmatpush1.bf16.msra.mxu0 0
        %1519 = vmatprep.subr.bf16.mxu0 0
        %1520 = vmatpush1.bf16.msra.mxu0 0
        %1521 = vmatprep.subr.bf16.mxu0 0
        %1522 = vmatpush1.bf16.msra.mxu0 0
        %1523 = vmatprep.subr.bf16.mxu0 0
        %1524 = vmatpush1.bf16.msra.mxu0 0
        %1525 = vmatprep.subr.bf16.mxu0 0
        %1526 = vmatpush1.bf16.msra.mxu0 0
        %1527 = vmatprep.subr.bf16.mxu0 0
        %1528 = vmatpush1.bf16.msra.mxu0 0
        %1529 = vmatprep.subr.bf16.mxu0 0
        %1530 = vmatpush1.bf16.msra.mxu0 0
        %1531 = vmatprep.subr.bf16.mxu0 0
        %1532 = vmatpush1.bf16.msra.mxu0 %v1512
        %1533 = vmatprep.subr.bf16.mxu0 0
        %1534 = vmatpush2.bf16.msra.mxu0 0
        %1535 = vmatprep.subr.bf16.mxu0 0
        %1536 = vmatpush2.bf16.msra.mxu0 0
        %1537 = vmatprep.subr.bf16.mxu0 0
        %1538 = vmatpush2.bf16.msra.mxu0 0
        %1539 = vmatprep.subr.bf16.mxu0 0
        %1540 = vmatpush2.bf16.msra.mxu0 0
        %1541 = vmatprep.subr.bf16.mxu0 0
        %1542 = vmatpush2.bf16.msra.mxu0 0
        %1543 = vmatprep.subr.bf16.mxu0 0
        %1544 = vmatpush2.bf16.msra.mxu0 0
        %1545 = vmatprep.subr.bf16.mxu0 0
        %1546 = vmatpush2.bf16.msra.mxu0 0
        %1547 = vmatprep.subr.bf16.mxu0 0
        %1548 = vmatpush2.bf16.msra.mxu0 0
        %1549 = vmatprep.mubr.bf16.mxu0 0
        %1550 = vmatmul.mubr.bf16.gmra.mxu0 %v1515
        %v1551 = vpop.f32.mrf.mxu0
        %v1552 = vadd.f32 0.0, %v1551
        %v1553 = vpop.f32.mrf.mxu0
        %v1554 = vpop.f32.mrf.mxu0
        %v1555 = vadd.f32 0.0, %v1554
        %v1556 = vpop.f32.mrf.mxu0
        %1557 = vdwg.mxu0
        %v1558 = vpack.c.bf16 %v1555, %v1552
        %v1560 = vunpack.c.l.b16 %v1558
        %v1561 = vunpack.c.h.b16 %v1558
        %v1562 = vpack.c.b16 %v1560, %v1560
        %v1563 = vpack.c.b16 %v1561, %v1561
        %1564 = vrot.lane.b32.xlu0 %v1562, 16
        %v1565 = vpop.permute.xlu0 %1564
        %1566 = vrot.lane.b32.xlu0 %v1563, 16
        %v1567 = vpop.permute.xlu0 %1566
        %vm1570 = vcmask 257152
        %1571 = vst.msk [vmem:[#allocation6] sm:$0xf] %vm1570, %v1565
        %1572 = vst.msk [vmem:[#allocation6 + $0x4] sm:$0xf] %vm1570, %v1567
        %v1573 = vld [vmem:[#allocation5] sm:$0xf]
        %v1574 = vld [vmem:[#allocation5 + $0x4] sm:$0xf]
        %v1575 = vunpack.c.l.bf16 %v1573
        %v1576 = vunpack.c.l.bf16 %v1574
        %s1577 = sld [smem:[#allocation7 + $0x2]]
        %v1578 = vstv %s1577
        %v1579 = vmul.f32 %v1575, %v1578
        %v1580 = vmul.f32 %v1576, %v1578
        %v1581 = vld [vmem:[%s1031] sm:$0xf]
        %v1582 = vld [vmem:[%s1031 + $0x4] sm:$0xf]
        %v1583 = vunpack.c.l.bf16 %v1581
        %v1584 = vunpack.c.l.bf16 %v1582
        %s1585 = sld [smem:[#allocation7 + $0x82]]
        %v1586 = vstv %s1585
        %v1587 = vmul.f32 %v1583, %v1586
        %v1588 = vmul.f32 %v1584, %v1586
        %v1589 = vadd.f32 %v1579, %v1587
        %v1590 = vadd.f32 %v1580, %v1588
        %v1591 = vld [vmem:[%s1133] sm:$0xf]
        %v1592 = vld [vmem:[%s1133 + $0x4] sm:$0xf]
        %v1593 = vunpack.c.l.bf16 %v1591
        %v1594 = vunpack.c.l.bf16 %v1592
        %s1595 = sld [smem:[#allocation7 + $0x102]]
        %v1596 = vstv %s1595
        %v1597 = vmul.f32 %v1593, %v1596
        %v1598 = vmul.f32 %v1594, %v1596
        %v1599 = vadd.f32 %v1589, %v1597
        %v1600 = vadd.f32 %v1590, %v1598
        %v1601 = vld [vmem:[%s1235] sm:$0xf]
        %v1602 = vld [vmem:[%s1235 + $0x4] sm:$0xf]
        %v1603 = vunpack.c.l.bf16 %v1601
        %v1604 = vunpack.c.l.bf16 %v1602
        %s1605 = sld [smem:[#allocation7 + $0x182]]
        %v1606 = vstv %s1605
        %v1607 = vmul.f32 %v1603, %v1606
        %v1608 = vmul.f32 %v1604, %v1606
        %v1609 = vadd.f32 %v1599, %v1607
        %v1610 = vadd.f32 %v1600, %v1608
        %v1611 = vsub.f32 %v1609, %v1244
        %v1612 = vsub.f32 %v1610, %v1245
        %v1613 = vmul.f32 %v1611, %v1354
        %v1614 = vmul.f32 %v1612, %v1355
        %s1615 = sld [smem:[#allocation13 + $0x2]]
        %v1616 = vstv %s1615
        %v1617 = vmul.f32 %v1613, %v1616
        %v1618 = vmul.f32 %v1614, %v1616
        %s1619 = sld [smem:[#allocation15 + $0x2]]
        %v1620 = vstv %s1619
        %v1621 = vadd.f32 %v1617, %v1620
        %v1622 = vadd.f32 %v1618, %v1620
        %v1623 = vpack.c.bf16 %v1622, %v1621
        %v1624 = vld [vmem:[#allocation3] sm:$0xf]
        %v1625 = vld [vmem:[#allocation3 + $0x4] sm:$0xf]
        %v1628 = vunpack.c.l.b16 %v1624
        %v1629 = vunpack.c.l.b16 %v1625
        %v1630 = vpack.c.b16 %v1629, %v1628
        %1631 = vrot.lane.b32.xlu0 %v1630, 96
        %v1632 = vpop.permute.xlu0 %1631
        %v1635 = vsel %vm856, %v1623, 0
        %1637 = vmatprep.subr.bf16.mxu0 0
        %1638 = vmatpush1.bf16.msra.mxu0 0
        %1639 = vmatprep.subr.bf16.mxu0 0
        %1640 = vmatpush1.bf16.msra.mxu0 0
        %1641 = vmatprep.subr.bf16.mxu0 0
        %1642 = vmatpush1.bf16.msra.mxu0 0
        %1643 = vmatprep.subr.bf16.mxu0 0
        %1644 = vmatpush1.bf16.msra.mxu0 0
        %1645 = vmatprep.subr.bf16.mxu0 0
        %1646 = vmatpush1.bf16.msra.mxu0 0
        %1647 = vmatprep.subr.bf16.mxu0 0
        %1648 = vmatpush1.bf16.msra.mxu0 0
        %1649 = vmatprep.subr.bf16.mxu0 0
        %1650 = vmatpush1.bf16.msra.mxu0 0
        %1651 = vmatprep.subr.bf16.mxu0 0
        %1652 = vmatpush1.bf16.msra.mxu0 %v1632
        %1653 = vmatprep.subr.bf16.mxu0 0
        %1654 = vmatpush2.bf16.msra.mxu0 0
        %1655 = vmatprep.subr.bf16.mxu0 0
        %1656 = vmatpush2.bf16.msra.mxu0 0
        %1657 = vmatprep.subr.bf16.mxu0 0
        %1658 = vmatpush2.bf16.msra.mxu0 0
        %1659 = vmatprep.subr.bf16.mxu0 0
        %1660 = vmatpush2.bf16.msra.mxu0 0
        %1661 = vmatprep.subr.bf16.mxu0 0
        %1662 = vmatpush2.bf16.msra.mxu0 0
        %1663 = vmatprep.subr.bf16.mxu0 0
        %1664 = vmatpush2.bf16.msra.mxu0 0
        %1665 = vmatprep.subr.bf16.mxu0 0
        %1666 = vmatpush2.bf16.msra.mxu0 0
        %1667 = vmatprep.subr.bf16.mxu0 0
        %1668 = vmatpush2.bf16.msra.mxu0 0
        %1669 = vmatprep.mubr.bf16.mxu0 0
        %1670 = vmatmul.mubr.bf16.gmra.mxu0 %v1635
        %v1671 = vpop.f32.mrf.mxu0
        %v1672 = vadd.f32 0.0, %v1671
        %v1673 = vpop.f32.mrf.mxu0
        %v1674 = vpop.f32.mrf.mxu0
        %v1675 = vadd.f32 0.0, %v1674
        %v1676 = vpop.f32.mrf.mxu0
        %1677 = vdwg.mxu0
        %v1678 = vpack.c.bf16 %v1675, %v1672
        %v1680 = vunpack.c.l.b16 %v1678
        %v1681 = vunpack.c.h.b16 %v1678
        %v1682 = vpack.c.b16 %v1680, %v1680
        %v1683 = vpack.c.b16 %v1681, %v1681
        %1684 = vrot.lane.b32.xlu0 %v1682, 32
        %v1685 = vpop.permute.xlu0 %1684
        %1686 = vrot.lane.b32.xlu0 %v1683, 32
        %v1687 = vpop.permute.xlu0 %1686
        %vm1690 = vcmask 388352
        %1691 = vst.msk [vmem:[#allocation6] sm:$0xf] %vm1690, %v1685
        %1692 = vst.msk [vmem:[#allocation6 + $0x4] sm:$0xf] %vm1690, %v1687
        %v1693 = vld [vmem:[#allocation5] sm:$0xf]
        %v1694 = vld [vmem:[#allocation5 + $0x4] sm:$0xf]
        %v1695 = vunpack.c.l.bf16 %v1693
        %v1696 = vunpack.c.l.bf16 %v1694
        %s1697 = sld [smem:[#allocation7 + $0x3]]
        %v1698 = vstv %s1697
        %v1699 = vmul.f32 %v1695, %v1698
        %v1700 = vmul.f32 %v1696, %v1698
        %v1701 = vld [vmem:[%s1031] sm:$0xf]
        %v1702 = vld [vmem:[%s1031 + $0x4] sm:$0xf]
        %v1703 = vunpack.c.l.bf16 %v1701
        %v1704 = vunpack.c.l.bf16 %v1702
        %s1705 = sld [smem:[#allocation7 + $0x83]]
        %v1706 = vstv %s1705
        %v1707 = vmul.f32 %v1703, %v1706
        %v1708 = vmul.f32 %v1704, %v1706
        %v1709 = vadd.f32 %v1699, %v1707
        %v1710 = vadd.f32 %v1700, %v1708
        %v1711 = vld [vmem:[%s1133] sm:$0xf]
        %v1712 = vld [vmem:[%s1133 + $0x4] sm:$0xf]
        %v1713 = vunpack.c.l.bf16 %v1711
        %v1714 = vunpack.c.l.bf16 %v1712
        %s1715 = sld [smem:[#allocation7 + $0x103]]
        %v1716 = vstv %s1715
        %v1717 = vmul.f32 %v1713, %v1716
        %v1718 = vmul.f32 %v1714, %v1716
        %v1719 = vadd.f32 %v1709, %v1717
        %v1720 = vadd.f32 %v1710, %v1718
        %v1721 = vld [vmem:[%s1235] sm:$0xf]
        %v1722 = vld [vmem:[%s1235 + $0x4] sm:$0xf]
        %v1723 = vunpack.c.l.bf16 %v1721
        %v1724 = vunpack.c.l.bf16 %v1722
        %s1725 = sld [smem:[#allocation7 + $0x183]]
        %v1726 = vstv %s1725
        %v1727 = vmul.f32 %v1723, %v1726
        %v1728 = vmul.f32 %v1724, %v1726
        %v1729 = vadd.f32 %v1719, %v1727
        %v1730 = vadd.f32 %v1720, %v1728
        %v1731 = vsub.f32 %v1729, %v1244
        %v1732 = vsub.f32 %v1730, %v1245
        %v1733 = vmul.f32 %v1731, %v1354
        %v1734 = vmul.f32 %v1732, %v1355
        %s1735 = sld [smem:[#allocation13 + $0x3]]
        %v1736 = vstv %s1735
        %v1737 = vmul.f32 %v1733, %v1736
        %v1738 = vmul.f32 %v1734, %v1736
        %s1739 = sld [smem:[#allocation15 + $0x3]]
        %v1740 = vstv %s1739
        %v1741 = vadd.f32 %v1737, %v1740
        %v1742 = vadd.f32 %v1738, %v1740
        %v1743 = vpack.c.bf16 %v1742, %v1741
        %v1744 = vld [vmem:[#allocation3] sm:$0xf]
        %v1745 = vld [vmem:[#allocation3 + $0x4] sm:$0xf]
        %v1748 = vunpack.c.l.b16 %v1744
        %v1749 = vunpack.c.l.b16 %v1745
        %v1750 = vpack.c.b16 %v1749, %v1748
        %1751 = vrot.lane.b32.xlu0 %v1750, 80
        %v1752 = vpop.permute.xlu0 %1751
        %v1755 = vsel %vm856, %v1743, 0
        %1757 = vmatprep.subr.bf16.mxu0 0
        %1758 = vmatpush1.bf16.msra.mxu0 0
        %1759 = vmatprep.subr.bf16.mxu0 0
        %1760 = vmatpush1.bf16.msra.mxu0 0
        %1761 = vmatprep.subr.bf16.mxu0 0
        %1762 = vmatpush1.bf16.msra.mxu0 0
        %1763 = vmatprep.subr.bf16.mxu0 0
        %1764 = vmatpush1.bf16.msra.mxu0 0
        %1765 = vmatprep.subr.bf16.mxu0 0
        %1766 = vmatpush1.bf16.msra.mxu0 0
        %1767 = vmatprep.subr.bf16.mxu0 0
        %1768 = vmatpush1.bf16.msra.mxu0 0
        %1769 = vmatprep.subr.bf16.mxu0 0
        %1770 = vmatpush1.bf16.msra.mxu0 0
        %1771 = vmatprep.subr.bf16.mxu0 0
        %1772 = vmatpush1.bf16.msra.mxu0 %v1752
        %1773 = vmatprep.subr.bf16.mxu0 0
        %1774 = vmatpush2.bf16.msra.mxu0 0
        %1775 = vmatprep.subr.bf16.mxu0 0
        %1776 = vmatpush2.bf16.msra.mxu0 0
        %1777 = vmatprep.subr.bf16.mxu0 0
        %1778 = vmatpush2.bf16.msra.mxu0 0
        %1779 = vmatprep.subr.bf16.mxu0 0
        %1780 = vmatpush2.bf16.msra.mxu0 0
        %1781 = vmatprep.subr.bf16.mxu0 0
        %1782 = vmatpush2.bf16.msra.mxu0 0
        %1783 = vmatprep.subr.bf16.mxu0 0
        %1784 = vmatpush2.bf16.msra.mxu0 0
        %1785 = vmatprep.subr.bf16.mxu0 0
        %1786 = vmatpush2.bf16.msra.mxu0 0
        %1787 = vmatprep.subr.bf16.mxu0 0
        %1788 = vmatpush2.bf16.msra.mxu0 0
        %1789 = vmatprep.mubr.bf16.mxu0 0
        %1790 = vmatmul.mubr.bf16.gmra.mxu0 %v1755
        %v1791 = vpop.f32.mrf.mxu0
        %v1792 = vadd.f32 0.0, %v1791
        %v1793 = vpop.f32.mrf.mxu0
        %v1794 = vpop.f32.mrf.mxu0
        %v1795 = vadd.f32 0.0, %v1794
        %v1796 = vpop.f32.mrf.mxu0
        %1797 = vdwg.mxu0
        %v1798 = vpack.c.bf16 %v1795, %v1792
        %v1800 = vunpack.c.l.b16 %v1798
        %v1801 = vunpack.c.h.b16 %v1798
        %v1802 = vpack.c.b16 %v1800, %v1800
        %v1803 = vpack.c.b16 %v1801, %v1801
        %1804 = vrot.lane.b32.xlu0 %v1802, 48
        %v1805 = vpop.permute.xlu0 %1804
        %1806 = vrot.lane.b32.xlu0 %v1803, 48
        %v1807 = vpop.permute.xlu0 %1806
        %vm1810 = vcmask 519552
        %1811 = vst.msk [vmem:[#allocation6] sm:$0xf] %vm1810, %v1805
        %1812 = vst.msk [vmem:[#allocation6 + $0x4] sm:$0xf] %vm1810, %v1807
        %v1813 = vld [vmem:[#allocation6] sm:$0xf]
        %v1814 = vld [vmem:[#allocation6 + $0x4] sm:$0xf]
        %v1815 = vld [vmem:[%s10] sm:$0xf]
        %v1816 = vld [vmem:[%s10 + $0x4] sm:$0xf]
        %v1817 = vld [vmem:[%s10 + $0x8] sm:$0xf]
        %v1818 = vld [vmem:[%s10 + $0xc] sm:$0xf]
        %v1819 = vld [vmem:[%s10 + $0x10] sm:$0xf]
        %v1820 = vld [vmem:[%s10 + $0x14] sm:$0xf]
        %v1821 = vld [vmem:[%s10 + $0x18] sm:$0xf]
        %v1822 = vld [vmem:[%s10 + $0x1c] sm:$0xf]
        %v1823 = vld [vmem:[%s11] sm:$0x1]
        %v1825 = vlaneseq
        %v1826 = vshrl.u32 %v1825, 7
        %v1827 = vsub.s32 0, %v1826
        %v1828 = vrot.slane %v1823, %v1827
        %v1832 = vunpack.c.l.b16 %v1813
        %v1833 = vunpack.c.l.b16 %v1814
        %v1834 = vpack.c.b16 %v1833, %v1832
        %v1843 = vunpack.c.l.b16 %v1815
        %v1844 = vunpack.c.l.b16 %v1816
        %v1845 = vunpack.c.l.b16 %v1817
        %v1846 = vunpack.c.l.b16 %v1818
        %v1847 = vunpack.c.l.b16 %v1819
        %v1848 = vunpack.c.l.b16 %v1820
        %v1849 = vunpack.c.l.b16 %v1821
        %v1850 = vunpack.c.l.b16 %v1822
        %v1851 = vpack.c.b16 %v1844, %v1843
        %v1852 = vpack.c.b16 %v1846, %v1845
        %v1853 = vpack.c.b16 %v1848, %v1847
        %v1854 = vpack.c.b16 %v1850, %v1849
        %vm1859 = vcmask 523264
        %v1861 = vsel %vm1859, %v1834, 0
        %1863 = vmatprep.subr.bf16.mxu0 0
        %1864 = vmatpush1.bf16.msra.mxu0 0
        %1865 = vmatprep.subr.bf16.mxu0 0
        %1866 = vmatpush1.bf16.msra.mxu0 0
        %1867 = vmatprep.subr.bf16.mxu0 0
        %1868 = vmatpush1.bf16.msra.mxu0 0
        %1869 = vmatprep.subr.bf16.mxu0 0
        %1870 = vmatpush1.bf16.msra.mxu0 0
        %1871 = vmatprep.subr.bf16.mxu0 0
        %1872 = vmatpush1.bf16.msra.mxu0 %v1854
        %1873 = vmatprep.subr.bf16.mxu0 0
        %1874 = vmatpush1.bf16.msra.mxu0 %v1853
        %1875 = vmatprep.subr.bf16.mxu0 0
        %1876 = vmatpush1.bf16.msra.mxu0 %v1852
        %1877 = vmatprep.subr.bf16.mxu0 0
        %1878 = vmatpush1.bf16.msra.mxu0 %v1851
        %1879 = vmatprep.subr.bf16.mxu0 0
        %1880 = vmatpush2.bf16.msra.mxu0 0
        %1881 = vmatprep.subr.bf16.mxu0 0
        %1882 = vmatpush2.bf16.msra.mxu0 0
        %1883 = vmatprep.subr.bf16.mxu0 0
        %1884 = vmatpush2.bf16.msra.mxu0 0
        %1885 = vmatprep.subr.bf16.mxu0 0
        %1886 = vmatpush2.bf16.msra.mxu0 0
        %1887 = vmatprep.subr.bf16.mxu0 0
        %1888 = vmatpush2.bf16.msra.mxu0 0
        %1889 = vmatprep.subr.bf16.mxu0 0
        %1890 = vmatpush2.bf16.msra.mxu0 0
        %1891 = vmatprep.subr.bf16.mxu0 0
        %1892 = vmatpush2.bf16.msra.mxu0 0
        %1893 = vmatprep.subr.bf16.mxu0 0
        %1894 = vmatpush2.bf16.msra.mxu0 0
        %1895 = vmatprep.mubr.bf16.mxu0 0
        %1896 = vmatmul.mubr.bf16.gmra.mxu0 %v1861
        %v1897 = vpop.f32.mrf.mxu0
        %v1898 = vadd.f32 %v1828, %v1897
        %v1899 = vpop.f32.mrf.mxu0
        %v1900 = vpop.f32.mrf.mxu0
        %v1901 = vadd.f32 %v1828, %v1900
        %v1902 = vpop.f32.mrf.mxu0
        %1903 = vdwg.mxu0
        %1904 = vst.msk [vmem:[%s499] sm:$0xff] %vm785, %v1898
        %1905 = vst.msk [vmem:[%s499 + $0x8] sm:$0xff] %vm785, %v1901
        %s1906 = sand.u32 %s313, 1
        %s1907 = scalar_lea.sflag [#allocation8], %s1906
        %s1908 = sand.u32 %s313, 1
        %s1909 = smul.addr %s1908, 16
        %s1910 = scalar_lea.vmem [#allocation16], %s1909
        // Predicated region
        $region93: #{tpu_custom_call.1} parent=67 // pred_check
          %p1911 = pneg %p323
        $region94: #{tpu_custom_call.1} parent=67 // pred_check_branch
          %1913 = sbr.rel (%p1911) target = $region96
        $region95: #{tpu_custom_call.1} parent=67 // pred_region
          %s1914 = smul.u32 2, %s34
          %s1916 = ssub.s32 256, 256
          %1917 = vsyncadd %s1907, %s1916
          %s1918 = smul.addr %s33, 2
          %s1919 = sadd.s32 %s1914, %s1918
          %s1920 = smul.addr %s1919, 128
          %s1921 = scalar_lea.hbm %s12, %s1920
          %s1922 = sshll.u32 %s1910, 4
          %s1923 = int_to_ptr.vmem [resolvable:$true] %s1922
          %1928 = dma.vmem_to_hbm [thread:$0]  %s1923, 256, %s1921, %s1907, 128, 128, 8
        $region96: #{tpu_custom_call.1} parent=67 // pred_fallthru
          _
      $region68: #{tpu_custom_call.1} parent=5 // pred_fallthru
        _
      %p1929 = scmp.le.s32.totalorder 2, %s24
      // Predicated region
      $region97: #{tpu_custom_call.1} parent=5 // pred_check
        %p1930 = pneg %p1929
      $region98: #{tpu_custom_call.1} parent=5 // pred_check_branch
        %1932 = sbr.rel (%p1930) target = $region100
      $region99: #{tpu_custom_call.1} parent=5 // pred_region
        %s1933 = ssub.s32 %s24, 2
        // Predicated region
        $region101: #{tpu_custom_call.1} parent=99 // pred_check
          %p1934 = pneg %p329
        $region102: #{tpu_custom_call.1} parent=99 // pred_check_branch
          %1936 = sbr.rel (%p1934) target = $region104
        $region103: #{tpu_custom_call.1} parent=99 // pred_region
          %s1937 = sand.u32 %s314, 1
          %s1938 = scalar_lea.sflag [#allocation8], %s1937
          %s1939 = sand.u32 %s314, 1
          %s1940 = smul.addr %s1939, 16
          %s1941 = scalar_lea.vmem [#allocation16], %s1940
          %1942 = dma.done %s1938, 256
        $region104: #{tpu_custom_call.1} parent=99 // pred_fallthru
          _
      $region100: #{tpu_custom_call.1} parent=5 // pred_fallthru
        _
    $region6: #{tpu_custom_call.1} parent=1 // loop_footer
      %s28 = sadd.s32 1, %s24
    $region7: #{tpu_custom_call.1} parent=1 // loop_footer_branch
      %23 = sbr.rel target = $region3
    $region8: #{tpu_custom_call.1} parent=1 // loop_exit
      _
    %1943 = vsyncpa [#allocation8], 1
    %s1944 = scalar_lea.sflag [#allocation8], 1
    %1945 = vsyncpa %s1944, 1
    %1946 = vsyncpa [#allocation9], 1
    %s1947 = scalar_lea.sflag [#allocation9], 1
    %1948 = vsyncpa %s1947, 1
    %1949 = vsyncpa [#allocation11], 1
    %1950 = vsyncpa [#allocation14], 1

</llo_original>
